<compile_context>
chip_gen: v7x
topology: tpu7x:2x2x1
jax: 0.10.0
libtpu: 0.0.40
codegen_flags: <defaults>
</compile_context>

<pallas_src>
import jax
import jax.numpy as jnp
from jax.experimental import pallas as pl
from jax.experimental.pallas import tpu as pltpu


LAYER_DIMS = [(28 * 28, 512), (512, 256), (256, 128), (128, 10)]


def _fused_mlp_kernel(x_ref,
                      w1_ref, b1_ref,
                      w2_ref, b2_ref,
                      w3_ref, b3_ref,
                      w4_ref, b4_ref,
                      o_ref):
    """out = L4(relu(L3(relu(L2(relu(L1(x))))))) entirely in VMEM."""
    # Layer 1 (784 -> 512) + ReLU.  bf16 operands, f32 accumulation + f32 bias.
    h = jnp.dot(x_ref[...], w1_ref[...], preferred_element_type=jnp.float32)
    h = jnp.maximum(h + b1_ref[...], 0.0).astype(w2_ref.dtype)
    # Layer 2 (512 -> 256) + ReLU.
    h = jnp.dot(h, w2_ref[...], preferred_element_type=jnp.float32)
    h = jnp.maximum(h + b2_ref[...], 0.0).astype(w3_ref.dtype)
    # Layer 3 (256 -> 128) + ReLU.
    h = jnp.dot(h, w3_ref[...], preferred_element_type=jnp.float32)
    h = jnp.maximum(h + b3_ref[...], 0.0).astype(w4_ref.dtype)
    # Layer 4 (128 -> 10), no activation.  The 10-wide logits write is the one
    # intentionally lane-narrow store left (negligible at this size).
    out = jnp.dot(h, w4_ref[...], preferred_element_type=jnp.float32)
    o_ref[...] = (out + b4_ref[...]).astype(o_ref.dtype)


def fused_mlp(x_flat, params):
    """x_flat: (B, 784) bf16; params: [(W (in,out) bf16, b (out,) f32)] x 4."""
    B = x_flat.shape[0]
    n_out = params[-1][0].shape[1]

    args = [x_flat]
    for w, b in params:
        args.append(w)
        args.append(b.reshape(1, -1))  # 2-D bias, broadcasts over the batch.

    vmem_spec = pl.BlockSpec(memory_space=pltpu.MemorySpace.VMEM)
    return pl.pallas_call(
        _fused_mlp_kernel,
        out_shape=jax.ShapeDtypeStruct((B, n_out), jnp.float32),
        in_specs=[vmem_spec] * len(args),
        out_specs=vmem_spec,
        compiler_params=pltpu.CompilerParams(
            # Whole problem (~1.2 MB of weights + tiny activations) fits
            # trivially; keep the limit modest so it is safe on every chip
            # generation (v5e scoped default 16 MiB, v7x physical 64 MiB).
            vmem_limit_bytes=32 * 1024 * 1024,
        ),
    )(*args)


def init_params(key):
    """Params matching torch nn.Linear shapes/init; weights stored (in, out).

    Weights are kept in bfloat16 (halves HBM traffic; the MXU is bf16-native),
    biases stay float32 and are added after the f32 accumulation.
    """
    params = []
    for fan_in, fan_out in LAYER_DIMS:
        key, kw, kb = jax.random.split(key, 3)
        bound = 1.0 / jnp.sqrt(fan_in)  # torch default Linear init scheme.
        w = jax.random.uniform(kw, (fan_in, fan_out), jnp.float32, -bound, bound)
        b = jax.random.uniform(kb, (fan_out,), jnp.float32, -bound, bound)
        params.append((w.astype(jnp.bfloat16), b))
    return params


def fully_connected_forward(x_nchw, params):
    B = x_nchw.shape[0]
    # nn.Flatten on an NCHW tensor: row-major flatten over (C, H, W) -> 784.
    x_flat = x_nchw.reshape(B, -1).astype(jnp.bfloat16)
    return fused_mlp(x_flat, params)


if __name__ == "__main__":
    key = jax.random.PRNGKey(0)
    key, kx = jax.random.split(key)

    # MNIST-style input consistent with the module's first Linear (28*28).
    x = jax.random.normal(kx, (2, 1, 28, 28), jnp.float32)
    params = init_params(key)

    fwd = jax.jit(fully_connected_forward)
    out = jax.block_until_ready(fwd(x, params))
    assert out.shape == (2, 10), out.shape

    # Plain-JAX reference of the same math (same bf16 cast points, f32 accum).
    def ref_forward(x_nchw, params):
        h = x_nchw.reshape(x_nchw.shape[0], -1)
        for i, (w, b) in enumerate(params):
            h = jnp.dot(h.astype(w.dtype), w,
                        preferred_element_type=jnp.float32) + b
            if i < len(params) - 1:
                h = jnp.maximum(h, 0.0)
        return h

    ref = jax.block_until_ready(ref_forward(x, params))
    assert jnp.allclose(out, ref, atol=1e-2, rtol=1e-2), (
        float(jnp.max(jnp.abs(out - ref))))

    print("KERNEL_OK")
</pallas_src>

<mosaic_0001>
module attributes {stable_mosaic.version = 11 : i64} {
  func.func @_fused_mlp_kernel(%arg0: memref<2x784xbf16, #tpu.memory_space<vmem>>, %arg1: memref<784x512xbf16, #tpu.memory_space<vmem>>, %arg2: memref<1x512xf32, #tpu.memory_space<vmem>>, %arg3: memref<512x256xbf16, #tpu.memory_space<vmem>>, %arg4: memref<1x256xf32, #tpu.memory_space<vmem>>, %arg5: memref<256x128xbf16, #tpu.memory_space<vmem>>, %arg6: memref<1x128xf32, #tpu.memory_space<vmem>>, %arg7: memref<128x10xbf16, #tpu.memory_space<vmem>>, %arg8: memref<1x10xf32, #tpu.memory_space<vmem>>, %arg9: memref<2x10xf32, #tpu.memory_space<vmem>>) attributes {dimension_semantics = [], scalar_prefetch = 0 : i64, scratch_operands = 0 : i64, tpu.core_type = #tpu.core_type<tc>} {
    %c0 = arith.constant 0 : index
    %c0_0 = arith.constant 0 : index
    %0 = vector.load %arg0[%c0, %c0_0] : memref<2x784xbf16, #tpu.memory_space<vmem>>, vector<2x784xbf16>
    %c0_1 = arith.constant 0 : index
    %c0_2 = arith.constant 0 : index
    %1 = vector.load %arg1[%c0_1, %c0_2] : memref<784x512xbf16, #tpu.memory_space<vmem>>, vector<784x512xbf16>
    %cst = arith.constant dense<0.000000e+00> : vector<2x512xf32>
    %2 = tpu.matmul %0, %1, %cst {dimension_numbers = #tpu.dot_dimension_numbers<[1], [0], [0], [1], [0, 0, 1, 1], [], []>} : vector<2x784xbf16>, vector<784x512xbf16>, vector<2x512xf32> -> vector<2x512xf32>
    %c0_3 = arith.constant 0 : index
    %c0_4 = arith.constant 0 : index
    %3 = vector.load %arg2[%c0_3, %c0_4] : memref<1x512xf32, #tpu.memory_space<vmem>>, vector<1x512xf32>
    %4 = vector.broadcast %3 : vector<1x512xf32> to vector<2x512xf32>
    %5 = arith.addf %2, %4 : vector<2x512xf32>
    %cst_5 = arith.constant 0.000000e+00 : f32
    %6 = vector.broadcast %cst_5 : f32 to vector<2x512xf32>
    %7 = arith.maximumf %5, %6 : vector<2x512xf32>
    %8 = arith.truncf %7 : vector<2x512xf32> to vector<2x512xbf16>
    %c0_6 = arith.constant 0 : index
    %c0_7 = arith.constant 0 : index
    %9 = vector.load %arg3[%c0_6, %c0_7] : memref<512x256xbf16, #tpu.memory_space<vmem>>, vector<512x256xbf16>
    %cst_8 = arith.constant dense<0.000000e+00> : vector<2x256xf32>
    %10 = tpu.matmul %8, %9, %cst_8 {dimension_numbers = #tpu.dot_dimension_numbers<[1], [0], [0], [1], [0, 0, 1, 1], [], []>} : vector<2x512xbf16>, vector<512x256xbf16>, vector<2x256xf32> -> vector<2x256xf32>
    %c0_9 = arith.constant 0 : index
    %c0_10 = arith.constant 0 : index
    %11 = vector.load %arg4[%c0_9, %c0_10] : memref<1x256xf32, #tpu.memory_space<vmem>>, vector<1x256xf32>
    %12 = vector.broadcast %11 : vector<1x256xf32> to vector<2x256xf32>
    %13 = arith.addf %10, %12 : vector<2x256xf32>
    %cst_11 = arith.constant 0.000000e+00 : f32
    %14 = vector.broadcast %cst_11 : f32 to vector<2x256xf32>
    %15 = arith.maximumf %13, %14 : vector<2x256xf32>
    %16 = arith.truncf %15 : vector<2x256xf32> to vector<2x256xbf16>
    %c0_12 = arith.constant 0 : index
    %c0_13 = arith.constant 0 : index
    %17 = vector.load %arg5[%c0_12, %c0_13] : memref<256x128xbf16, #tpu.memory_space<vmem>>, vector<256x128xbf16>
    %cst_14 = arith.constant dense<0.000000e+00> : vector<2x128xf32>
    %18 = tpu.matmul %16, %17, %cst_14 {dimension_numbers = #tpu.dot_dimension_numbers<[1], [0], [0], [1], [0, 0, 1, 1], [], []>} : vector<2x256xbf16>, vector<256x128xbf16>, vector<2x128xf32> -> vector<2x128xf32>
    %c0_15 = arith.constant 0 : index
    %c0_16 = arith.constant 0 : index
    %19 = vector.load %arg6[%c0_15, %c0_16] : memref<1x128xf32, #tpu.memory_space<vmem>>, vector<1x128xf32>
    %20 = vector.broadcast %19 : vector<1x128xf32> to vector<2x128xf32>
    %21 = arith.addf %18, %20 : vector<2x128xf32>
    %cst_17 = arith.constant 0.000000e+00 : f32
    %22 = vector.broadcast %cst_17 : f32 to vector<2x128xf32>
    %23 = arith.maximumf %21, %22 : vector<2x128xf32>
    %24 = arith.truncf %23 : vector<2x128xf32> to vector<2x128xbf16>
    %c0_18 = arith.constant 0 : index
    %c0_19 = arith.constant 0 : index
    %25 = vector.load %arg7[%c0_18, %c0_19] : memref<128x10xbf16, #tpu.memory_space<vmem>>, vector<128x10xbf16>
    %cst_20 = arith.constant dense<0.000000e+00> : vector<2x10xf32>
    %26 = tpu.matmul %24, %25, %cst_20 {dimension_numbers = #tpu.dot_dimension_numbers<[1], [0], [0], [1], [0, 0, 1, 1], [], []>} : vector<2x128xbf16>, vector<128x10xbf16>, vector<2x10xf32> -> vector<2x10xf32>
    %c0_21 = arith.constant 0 : index
    %c0_22 = arith.constant 0 : index
    %27 = vector.load %arg8[%c0_21, %c0_22] : memref<1x10xf32, #tpu.memory_space<vmem>>, vector<1x10xf32>
    %28 = vector.broadcast %27 : vector<1x10xf32> to vector<2x10xf32>
    %29 = arith.addf %26, %28 : vector<2x10xf32>
    %c0_23 = arith.constant 0 : index
    %c0_24 = arith.constant 0 : index
    %30 = vector.load %arg9[%c0_23, %c0_24] : memref<2x10xf32, #tpu.memory_space<vmem>>, vector<2x10xf32>
    tpu.vector_store %arg9[%c0_23, %c0_24], %29 {strides = array<i32>} : memref<2x10xf32, #tpu.memory_space<vmem>>, vector<2x10xf32>,
    return
  }
}

</mosaic_0001>

<llo_original>
// kernel: fully_connected_forward.1
$region0: #{fully_connected_forward.1}
  #allocation0 [shape = 'u32[]', space=smem, size = 0x4, offset = 0x4, fixed_abs, tag = 'smem constant byte address 0x4 - core index']
  #allocation1 [shape = 'u32[144,128]{1,0:T(1,128)}', space=vmem, size = 0x12000, scoped, tag = 'internal scratch']
  %s0 = inlined_call_operand.vmem [shape: bf16[2,784], index: 0, kind: input, shape index: {}]
  %s1 = inlined_call_operand.hbm [shape: bf16[784,512], index: 1, kind: input, shape index: {}]
  %s2 = inlined_call_operand.vmem [shape: f32[1,512], index: 2, kind: input, shape index: {}]
  %s3 = inlined_call_operand.hbm [shape: bf16[512,256], index: 3, kind: input, shape index: {}]
  %s4 = inlined_call_operand.vmem [shape: f32[1,256], index: 4, kind: input, shape index: {}]
  %s5 = inlined_call_operand.vmem [shape: bf16[256,128], index: 5, kind: input, shape index: {}]
  %s6 = inlined_call_operand.vmem [shape: f32[1,128], index: 6, kind: input, shape index: {}]
  %s7 = inlined_call_operand.vmem [shape: bf16[128,10], index: 7, kind: input, shape index: {}]
  %s8 = inlined_call_operand.vmem [shape: f32[1,10], index: 8, kind: input, shape index: {}]
  %s9 = inlined_call_operand.hbm [shape: f32[2,10], index: 9, kind: output, shape index: {}]
  %s10 = sld [smem:[#allocation0]]
  $region54: #{fully_connected_forward.1} parent=0
    _
  %s12 = ssub.s32 1, %s10
  %s13 = scalar_select 0, %s12, %s10
  $region1: #{fully_connected_forward.1} parent=0
    #allocation2 [shape = 'u8[802816]{0}', space=vmem, size = 0xc4000, scoped, tag = 'input window, operand 1, single buffered']
    #allocation3 [shape = 's32[1]{0}', space=sflag, size = 0x4, scoped, tag = 'scoped memory for fully_connected_forward.1']
    #allocation4 [shape = 's32[1]{0}', space=sflag, size = 0x4, scoped, tag = 'scoped memory for fully_connected_forward.1']
    #allocation5 [shape = 'u8[262144]{0}', space=vmem, size = 0x40000, scoped, tag = 'input window, operand 3, single buffered']
    #allocation6 [shape = 's32[1]{0}', space=sflag, size = 0x4, scoped, tag = 'scoped memory for fully_connected_forward.1']
    #allocation7 [shape = 'u8[1024]{0}', space=vmem, size = 0x400, scoped, tag = 'output window, operand 0, single buffered']
    %14 = vsyncpa [#allocation3], 0
    %15 = vsyncpa [#allocation6], 0
    %16 = vsyncpa [#allocation4], 0
    // Predicated region
    $region2: #{fully_connected_forward.1} parent=1 // pred_check
      _
    $region3: #{fully_connected_forward.1} parent=1 // pred_check_branch
      %18 = sbr.rel (0) target = $region5
    $region4: #{fully_connected_forward.1} parent=1 // pred_region
      _
    $region5: #{fully_connected_forward.1} parent=1 // pred_fallthru
      _
    // Predicated region
    $region6: #{fully_connected_forward.1} parent=1 // pred_check
      _
    $region7: #{fully_connected_forward.1} parent=1 // pred_check_branch
      %20 = sbr.rel (0) target = $region9
    $region8: #{fully_connected_forward.1} parent=1 // pred_region
      %s22 = ssub.s32 25088, 25088
      %23 = vsyncadd [#allocation3], %s22
      %s24 = sshll.u32 [#allocation2], 4
      %s25 = int_to_ptr.vmem [resolvable:$true] %s24
      %30 = dma.hbm_to_vmem [thread:$0]  %s1, 25088, %s25, [#allocation3], 256, 256, 16
    $region9: #{fully_connected_forward.1} parent=1 // pred_fallthru
      _
    // Predicated region
    $region10: #{fully_connected_forward.1} parent=1 // pred_check
      _
    $region11: #{fully_connected_forward.1} parent=1 // pred_check_branch
      %32 = sbr.rel (0) target = $region13
    $region12: #{fully_connected_forward.1} parent=1 // pred_region
      _
    $region13: #{fully_connected_forward.1} parent=1 // pred_fallthru
      _
    // Predicated region
    $region14: #{fully_connected_forward.1} parent=1 // pred_check
      _
    $region15: #{fully_connected_forward.1} parent=1 // pred_check_branch
      %34 = sbr.rel (0) target = $region17
    $region16: #{fully_connected_forward.1} parent=1 // pred_region
      %s36 = ssub.s32 8192, 8192
      %37 = vsyncadd [#allocation6], %s36
      %s38 = sshll.u32 [#allocation5], 4
      %s39 = int_to_ptr.vmem [resolvable:$true] %s38
      %44 = dma.hbm_to_vmem [thread:$0]  %s3, 8192, %s39, [#allocation6], 128, 128, 8
    $region17: #{fully_connected_forward.1} parent=1 // pred_fallthru
      _
    // Predicated region
    $region18: #{fully_connected_forward.1} parent=1 // pred_check
      _
    $region19: #{fully_connected_forward.1} parent=1 // pred_check_branch
      %46 = sbr.rel (0) target = $region21
    $region20: #{fully_connected_forward.1} parent=1 // pred_region
      _
    $region21: #{fully_connected_forward.1} parent=1 // pred_fallthru
      _
    // Predicated region
    $region22: #{fully_connected_forward.1} parent=1 // pred_check
      _
    $region23: #{fully_connected_forward.1} parent=1 // pred_check_branch
      %48 = sbr.rel (0) target = $region25
    $region24: #{fully_connected_forward.1} parent=1 // pred_region
      _
    $region25: #{fully_connected_forward.1} parent=1 // pred_fallthru
      _
    // Predicated region
    $region26: #{fully_connected_forward.1} parent=1 // pred_check
      _
    $region27: #{fully_connected_forward.1} parent=1 // pred_check_branch
      %50 = sbr.rel (0) target = $region29
    $region28: #{fully_connected_forward.1} parent=1 // pred_region
      _
    $region29: #{fully_connected_forward.1} parent=1 // pred_fallthru
      _
    // Predicated region
    $region30: #{fully_connected_forward.1} parent=1 // pred_check
      _
    $region31: #{fully_connected_forward.1} parent=1 // pred_check_branch
      %52 = sbr.rel (0) target = $region33
    $region32: #{fully_connected_forward.1} parent=1 // pred_region
      _
    $region33: #{fully_connected_forward.1} parent=1 // pred_fallthru
      _
    // Predicated region
    $region34: #{fully_connected_forward.1} parent=1 // pred_check
      _
    $region35: #{fully_connected_forward.1} parent=1 // pred_check_branch
      %54 = sbr.rel (0) target = $region37
    $region36: #{fully_connected_forward.1} parent=1 // pred_region
      _
    $region37: #{fully_connected_forward.1} parent=1 // pred_fallthru
      _
    // Predicated region
    $region38: #{fully_connected_forward.1} parent=1 // pred_check
      _
    $region39: #{fully_connected_forward.1} parent=1 // pred_check_branch
      %56 = sbr.rel (0) target = $region41
    $region40: #{fully_connected_forward.1} parent=1 // pred_region
      %57 = dma.done [#allocation3], 25088
    $region41: #{fully_connected_forward.1} parent=1 // pred_fallthru
      _
    // Predicated region
    $region42: #{fully_connected_forward.1} parent=1 // pred_check
      _
    $region43: #{fully_connected_forward.1} parent=1 // pred_check_branch
      %59 = sbr.rel (0) target = $region45
    $region44: #{fully_connected_forward.1} parent=1 // pred_region
      %60 = dma.done [#allocation6], 8192
    $region45: #{fully_connected_forward.1} parent=1 // pred_fallthru
      _
    %v62 = vld [vmem:[%s0] sm:$0x7f]
    %v63 = vld [vmem:[#allocation2] sm:$0xff]
    %v64 = vld [vmem:[#allocation2 + $0x8] sm:$0xff]
    %v65 = vld [vmem:[#allocation2 + $0x10] sm:$0xff]
    %v66 = vld [vmem:[#allocation2 + $0x18] sm:$0xff]
    %v67 = vld [vmem:[#allocation2 + $0x20] sm:$0xff]
    %v68 = vld [vmem:[#allocation2 + $0x28] sm:$0xff]
    %v69 = vld [vmem:[#allocation2 + $0x30] sm:$0xff]
    %v70 = vld [vmem:[#allocation2 + $0x38] sm:$0xff]
    %v71 = vld [vmem:[#allocation2 + $0x40] sm:$0xff]
    %v72 = vld [vmem:[#allocation2 + $0x48] sm:$0xff]
    %v73 = vld [vmem:[#allocation2 + $0x50] sm:$0xff]
    %v74 = vld [vmem:[#allocation2 + $0x58] sm:$0xff]
    %v75 = vld [vmem:[#allocation2 + $0x60] sm:$0xff]
    %v76 = vld [vmem:[#allocation2 + $0x68] sm:$0xff]
    %v77 = vld [vmem:[#allocation2 + $0x70] sm:$0xff]
    %v78 = vld [vmem:[#allocation2 + $0x78] sm:$0xff]
    %v79 = vld [vmem:[#allocation2 + $0x80] sm:$0xff]
    %v80 = vld [vmem:[#allocation2 + $0x88] sm:$0xff]
    %v81 = vld [vmem:[#allocation2 + $0x90] sm:$0xff]
    %v82 = vld [vmem:[#allocation2 + $0x98] sm:$0xff]
    %v83 = vld [vmem:[#allocation2 + $0xa0] sm:$0xff]
    %v84 = vld [vmem:[#allocation2 + $0xa8] sm:$0xff]
    %v85 = vld [vmem:[#allocation2 + $0xb0] sm:$0xff]
    %v86 = vld [vmem:[#allocation2 + $0xb8] sm:$0xff]
    %v87 = vld [vmem:[#allocation2 + $0xc0] sm:$0xff]
    %v88 = vld [vmem:[#allocation2 + $0xc8] sm:$0xff]
    %v89 = vld [vmem:[#allocation2 + $0xd0] sm:$0xff]
    %v90 = vld [vmem:[#allocation2 + $0xd8] sm:$0xff]
    %v91 = vld [vmem:[#allocation2 + $0xe0] sm:$0xff]
    %v92 = vld [vmem:[#allocation2 + $0xe8] sm:$0xff]
    %v93 = vld [vmem:[#allocation2 + $0xf0] sm:$0xff]
    %v94 = vld [vmem:[#allocation2 + $0xf8] sm:$0xff]
    %v95 = vld [vmem:[#allocation2 + $0x100] sm:$0xff]
    %v96 = vld [vmem:[#allocation2 + $0x108] sm:$0xff]
    %v97 = vld [vmem:[#allocation2 + $0x110] sm:$0xff]
    %v98 = vld [vmem:[#allocation2 + $0x118] sm:$0xff]
    %v99 = vld [vmem:[#allocation2 + $0x120] sm:$0xff]
    %v100 = vld [vmem:[#allocation2 + $0x128] sm:$0xff]
    %v101 = vld [vmem:[#allocation2 + $0x130] sm:$0xff]
    %v102 = vld [vmem:[#allocation2 + $0x138] sm:$0xff]
    %v103 = vld [vmem:[#allocation2 + $0x140] sm:$0xff]
    %v104 = vld [vmem:[#allocation2 + $0x148] sm:$0xff]
    %v105 = vld [vmem:[#allocation2 + $0x150] sm:$0xff]
    %v106 = vld [vmem:[#allocation2 + $0x158] sm:$0xff]
    %v107 = vld [vmem:[#allocation2 + $0x160] sm:$0xff]
    %v108 = vld [vmem:[#allocation2 + $0x168] sm:$0xff]
    %v109 = vld [vmem:[#allocation2 + $0x170] sm:$0xff]
    %v110 = vld [vmem:[#allocation2 + $0x178] sm:$0xff]
    %v111 = vld [vmem:[#allocation2 + $0x180] sm:$0xff]
    %v112 = vld [vmem:[#allocation2 + $0x188] sm:$0xff]
    %v113 = vld [vmem:[#allocation2 + $0x190] sm:$0xff]
    %v114 = vld [vmem:[#allocation2 + $0x198] sm:$0xff]
    %v115 = vld [vmem:[#allocation2 + $0x1a0] sm:$0xff]
    %v116 = vld [vmem:[#allocation2 + $0x1a8] sm:$0xff]
    %v117 = vld [vmem:[#allocation2 + $0x1b0] sm:$0xff]
    %v118 = vld [vmem:[#allocation2 + $0x1b8] sm:$0xff]
    %v119 = vld [vmem:[#allocation2 + $0x1c0] sm:$0xff]
    %v120 = vld [vmem:[#allocation2 + $0x1c8] sm:$0xff]
    %v121 = vld [vmem:[#allocation2 + $0x1d0] sm:$0xff]
    %v122 = vld [vmem:[#allocation2 + $0x1d8] sm:$0xff]
    %v123 = vld [vmem:[#allocation2 + $0x1e0] sm:$0xff]
    %v124 = vld [vmem:[#allocation2 + $0x1e8] sm:$0xff]
    %v125 = vld [vmem:[#allocation2 + $0x1f0] sm:$0xff]
    %v126 = vld [vmem:[#allocation2 + $0x1f8] sm:$0xff]
    %v127 = vld [vmem:[#allocation2 + $0x200] sm:$0xff]
    %v128 = vld [vmem:[#allocation2 + $0x208] sm:$0xff]
    %v129 = vld [vmem:[#allocation2 + $0x210] sm:$0xff]
    %v130 = vld [vmem:[#allocation2 + $0x218] sm:$0xff]
    %v131 = vld [vmem:[#allocation2 + $0x220] sm:$0xff]
    %v132 = vld [vmem:[#allocation2 + $0x228] sm:$0xff]
    %v133 = vld [vmem:[#allocation2 + $0x230] sm:$0xff]
    %v134 = vld [vmem:[#allocation2 + $0x238] sm:$0xff]
    %v135 = vld [vmem:[#allocation2 + $0x240] sm:$0xff]
    %v136 = vld [vmem:[#allocation2 + $0x248] sm:$0xff]
    %v137 = vld [vmem:[#allocation2 + $0x250] sm:$0xff]
    %v138 = vld [vmem:[#allocation2 + $0x258] sm:$0xff]
    %v139 = vld [vmem:[#allocation2 + $0x260] sm:$0xff]
    %v140 = vld [vmem:[#allocation2 + $0x268] sm:$0xff]
    %v141 = vld [vmem:[#allocation2 + $0x270] sm:$0xff]
    %v142 = vld [vmem:[#allocation2 + $0x278] sm:$0xff]
    %v143 = vld [vmem:[#allocation2 + $0x280] sm:$0xff]
    %v144 = vld [vmem:[#allocation2 + $0x288] sm:$0xff]
    %v145 = vld [vmem:[#allocation2 + $0x290] sm:$0xff]
    %v146 = vld [vmem:[#allocation2 + $0x298] sm:$0xff]
    %v147 = vld [vmem:[#allocation2 + $0x2a0] sm:$0xff]
    %v148 = vld [vmem:[#allocation2 + $0x2a8] sm:$0xff]
    %v149 = vld [vmem:[#allocation2 + $0x2b0] sm:$0xff]
    %v150 = vld [vmem:[#allocation2 + $0x2b8] sm:$0xff]
    %v151 = vld [vmem:[#allocation2 + $0x2c0] sm:$0xff]
    %v152 = vld [vmem:[#allocation2 + $0x2c8] sm:$0xff]
    %v153 = vld [vmem:[#allocation2 + $0x2d0] sm:$0xff]
    %v154 = vld [vmem:[#allocation2 + $0x2d8] sm:$0xff]
    %v155 = vld [vmem:[#allocation2 + $0x2e0] sm:$0xff]
    %v156 = vld [vmem:[#allocation2 + $0x2e8] sm:$0xff]
    %v157 = vld [vmem:[#allocation2 + $0x2f0] sm:$0xff]
    %v158 = vld [vmem:[#allocation2 + $0x2f8] sm:$0xff]
    %v159 = vld [vmem:[#allocation2 + $0x300] sm:$0xff]
    %v160 = vld [vmem:[#allocation2 + $0x308] sm:$0xff]
    %v161 = vld [vmem:[#allocation2 + $0x310] sm:$0xff]
    %v162 = vld [vmem:[#allocation2 + $0x318] sm:$0xff]
    %v163 = vld [vmem:[#allocation2 + $0x320] sm:$0xff]
    %v164 = vld [vmem:[#allocation2 + $0x328] sm:$0xff]
    %v165 = vld [vmem:[#allocation2 + $0x330] sm:$0xff]
    %v166 = vld [vmem:[#allocation2 + $0x338] sm:$0xff]
    %v167 = vld [vmem:[#allocation2 + $0x340] sm:$0xff]
    %v168 = vld [vmem:[#allocation2 + $0x348] sm:$0xff]
    %v169 = vld [vmem:[#allocation2 + $0x350] sm:$0xff]
    %v170 = vld [vmem:[#allocation2 + $0x358] sm:$0xff]
    %v171 = vld [vmem:[#allocation2 + $0x360] sm:$0xff]
    %v172 = vld [vmem:[#allocation2 + $0x368] sm:$0xff]
    %v173 = vld [vmem:[#allocation2 + $0x370] sm:$0xff]
    %v174 = vld [vmem:[#allocation2 + $0x378] sm:$0xff]
    %v175 = vld [vmem:[#allocation2 + $0x380] sm:$0xff]
    %v176 = vld [vmem:[#allocation2 + $0x388] sm:$0xff]
    %v177 = vld [vmem:[#allocation2 + $0x390] sm:$0xff]
    %v178 = vld [vmem:[#allocation2 + $0x398] sm:$0xff]
    %v179 = vld [vmem:[#allocation2 + $0x3a0] sm:$0xff]
    %v180 = vld [vmem:[#allocation2 + $0x3a8] sm:$0xff]
    %v181 = vld [vmem:[#allocation2 + $0x3b0] sm:$0xff]
    %v182 = vld [vmem:[#allocation2 + $0x3b8] sm:$0xff]
    %v183 = vld [vmem:[#allocation2 + $0x3c0] sm:$0xff]
    %v184 = vld [vmem:[#allocation2 + $0x3c8] sm:$0xff]
    %v185 = vld [vmem:[#allocation2 + $0x3d0] sm:$0xff]
    %v186 = vld [vmem:[#allocation2 + $0x3d8] sm:$0xff]
    %v187 = vld [vmem:[#allocation2 + $0x3e0] sm:$0xff]
    %v188 = vld [vmem:[#allocation2 + $0x3e8] sm:$0xff]
    %v189 = vld [vmem:[#allocation2 + $0x3f0] sm:$0xff]
    %v190 = vld [vmem:[#allocation2 + $0x3f8] sm:$0xff]
    %v191 = vld [vmem:[#allocation2 + $0x400] sm:$0xff]
    %v192 = vld [vmem:[#allocation2 + $0x408] sm:$0xff]
    %v193 = vld [vmem:[#allocation2 + $0x410] sm:$0xff]
    %v194 = vld [vmem:[#allocation2 + $0x418] sm:$0xff]
    %v195 = vld [vmem:[#allocation2 + $0x420] sm:$0xff]
    %v196 = vld [vmem:[#allocation2 + $0x428] sm:$0xff]
    %v197 = vld [vmem:[#allocation2 + $0x430] sm:$0xff]
    %v198 = vld [vmem:[#allocation2 + $0x438] sm:$0xff]
    %v199 = vld [vmem:[#allocation2 + $0x440] sm:$0xff]
    %v200 = vld [vmem:[#allocation2 + $0x448] sm:$0xff]
    %v201 = vld [vmem:[#allocation2 + $0x450] sm:$0xff]
    %v202 = vld [vmem:[#allocation2 + $0x458] sm:$0xff]
    %v203 = vld [vmem:[#allocation2 + $0x460] sm:$0xff]
    %v204 = vld [vmem:[#allocation2 + $0x468] sm:$0xff]
    %v205 = vld [vmem:[#allocation2 + $0x470] sm:$0xff]
    %v206 = vld [vmem:[#allocation2 + $0x478] sm:$0xff]
    %v207 = vld [vmem:[#allocation2 + $0x480] sm:$0xff]
    %v208 = vld [vmem:[#allocation2 + $0x488] sm:$0xff]
    %v209 = vld [vmem:[#allocation2 + $0x490] sm:$0xff]
    %v210 = vld [vmem:[#allocation2 + $0x498] sm:$0xff]
    %v211 = vld [vmem:[#allocation2 + $0x4a0] sm:$0xff]
    %v212 = vld [vmem:[#allocation2 + $0x4a8] sm:$0xff]
    %v213 = vld [vmem:[#allocation2 + $0x4b0] sm:$0xff]
    %v214 = vld [vmem:[#allocation2 + $0x4b8] sm:$0xff]
    %v215 = vld [vmem:[#allocation2 + $0x4c0] sm:$0xff]
    %v216 = vld [vmem:[#allocation2 + $0x4c8] sm:$0xff]
    %v217 = vld [vmem:[#allocation2 + $0x4d0] sm:$0xff]
    %v218 = vld [vmem:[#allocation2 + $0x4d8] sm:$0xff]
    %v219 = vld [vmem:[#allocation2 + $0x4e0] sm:$0xff]
    %v220 = vld [vmem:[#allocation2 + $0x4e8] sm:$0xff]
    %v221 = vld [vmem:[#allocation2 + $0x4f0] sm:$0xff]
    %v222 = vld [vmem:[#allocation2 + $0x4f8] sm:$0xff]
    %v223 = vld [vmem:[#allocation2 + $0x500] sm:$0xff]
    %v224 = vld [vmem:[#allocation2 + $0x508] sm:$0xff]
    %v225 = vld [vmem:[#allocation2 + $0x510] sm:$0xff]
    %v226 = vld [vmem:[#allocation2 + $0x518] sm:$0xff]
    %v227 = vld [vmem:[#allocation2 + $0x520] sm:$0xff]
    %v228 = vld [vmem:[#allocation2 + $0x528] sm:$0xff]
    %v229 = vld [vmem:[#allocation2 + $0x530] sm:$0xff]
    %v230 = vld [vmem:[#allocation2 + $0x538] sm:$0xff]
    %v231 = vld [vmem:[#allocation2 + $0x540] sm:$0xff]
    %v232 = vld [vmem:[#allocation2 + $0x548] sm:$0xff]
    %v233 = vld [vmem:[#allocation2 + $0x550] sm:$0xff]
    %v234 = vld [vmem:[#allocation2 + $0x558] sm:$0xff]
    %v235 = vld [vmem:[#allocation2 + $0x560] sm:$0xff]
    %v236 = vld [vmem:[#allocation2 + $0x568] sm:$0xff]
    %v237 = vld [vmem:[#allocation2 + $0x570] sm:$0xff]
    %v238 = vld [vmem:[#allocation2 + $0x578] sm:$0xff]
    %v239 = vld [vmem:[#allocation2 + $0x580] sm:$0xff]
    %v240 = vld [vmem:[#allocation2 + $0x588] sm:$0xff]
    %v241 = vld [vmem:[#allocation2 + $0x590] sm:$0xff]
    %v242 = vld [vmem:[#allocation2 + $0x598] sm:$0xff]
    %v243 = vld [vmem:[#allocation2 + $0x5a0] sm:$0xff]
    %v244 = vld [vmem:[#allocation2 + $0x5a8] sm:$0xff]
    %v245 = vld [vmem:[#allocation2 + $0x5b0] sm:$0xff]
    %v246 = vld [vmem:[#allocation2 + $0x5b8] sm:$0xff]
    %v247 = vld [vmem:[#allocation2 + $0x5c0] sm:$0xff]
    %v248 = vld [vmem:[#allocation2 + $0x5c8] sm:$0xff]
    %v249 = vld [vmem:[#allocation2 + $0x5d0] sm:$0xff]
    %v250 = vld [vmem:[#allocation2 + $0x5d8] sm:$0xff]
    %v251 = vld [vmem:[#allocation2 + $0x5e0] sm:$0xff]
    %v252 = vld [vmem:[#allocation2 + $0x5e8] sm:$0xff]
    %v253 = vld [vmem:[#allocation2 + $0x5f0] sm:$0xff]
    %v254 = vld [vmem:[#allocation2 + $0x5f8] sm:$0xff]
    %v255 = vld [vmem:[#allocation2 + $0x600] sm:$0xff]
    %v256 = vld [vmem:[#allocation2 + $0x608] sm:$0xff]
    %v257 = vld [vmem:[#allocation2 + $0x610] sm:$0xff]
    %v258 = vld [vmem:[#allocation2 + $0x618] sm:$0xff]
    %v259 = vld [vmem:[%s2] sm:$0xf]
    %v261 = vlaneseq
    %v262 = vshrl.u32 %v261, 7
    %v263 = vsub.s32 0, %v262
    %v264 = vrot.slane %v259, %v263
    %v265 = vlaneseq
    %v266 = vshrl.u32 %v265, 7
    %v267 = vsub.s32 1, %v266
    %v268 = vrot.slane %v259, %v267
    %v269 = vlaneseq
    %v270 = vshrl.u32 %v269, 7
    %v271 = vsub.s32 2, %v270
    %v272 = vrot.slane %v259, %v271
    %v273 = vlaneseq
    %v274 = vshrl.u32 %v273, 7
    %v275 = vsub.s32 3, %v274
    %v276 = vrot.slane %v259, %v275
    %v282 = vcombine.high %v62, %v62
    %v284 = vunpack.c.l.s4 1966171168
    %v285 = vunpack.c.0.s8 %v284
    %v286 = vlaneseq
    %v287 = vshrl.u32 %v286, 7
    %v288 = vsub.s32 %v285, %v287
    %v289 = vrot.slane %v62, %v288
    %v291 = vunpack.c.l.s4 1966171168
    %v292 = vunpack.c.0.s8 %v291
    %v293 = vlaneseq
    %v294 = vshrl.u32 %v293, 7
    %v295 = vsub.s32 %v292, %v294
    %v296 = vrot.slane %v282, %v295
    %v297 = vcombine.high %v289, %v289
    %v298 = vcombine.high %v296, %v296
    %v300 = vunpack.c.l.s4 1966171168
    %v301 = vunpack.c.0.s8 %v300
    %v302 = vlaneseq
    %v303 = vshrl.u32 %v302, 7
    %v304 = vsub.s32 %v301, %v303
    %v305 = vrot.slane %v289, %v304
    %v307 = vunpack.c.l.s4 1966171168
    %v308 = vunpack.c.0.s8 %v307
    %v309 = vlaneseq
    %v310 = vshrl.u32 %v309, 7
    %v311 = vsub.s32 %v308, %v310
    %v312 = vrot.slane %v296, %v311
    %v314 = vunpack.c.l.s4 1966171168
    %v315 = vunpack.c.0.s8 %v314
    %v316 = vlaneseq
    %v317 = vshrl.u32 %v316, 7
    %v318 = vsub.s32 %v315, %v317
    %v319 = vrot.slane %v297, %v318
    %v321 = vunpack.c.l.s4 1966171168
    %v322 = vunpack.c.0.s8 %v321
    %v323 = vlaneseq
    %v324 = vshrl.u32 %v323, 7
    %v325 = vsub.s32 %v322, %v324
    %v326 = vrot.slane %v298, %v325
    %v327 = vcombine.high %v305, %v305
    %v328 = vcombine.high %v312, %v312
    %v329 = vcombine.high %v319, %v319
    %v532 = vunpack.c.l.b16 %v63
    %v533 = vunpack.c.h.b16 %v63
    %v534 = vunpack.c.l.b16 %v64
    %v535 = vunpack.c.h.b16 %v64
    %v536 = vunpack.c.l.b16 %v65
    %v537 = vunpack.c.h.b16 %v65
    %v538 = vunpack.c.l.b16 %v66
    %v539 = vunpack.c.h.b16 %v66
    %v540 = vunpack.c.l.b16 %v67
    %v541 = vunpack.c.h.b16 %v67
    %v542 = vunpack.c.l.b16 %v68
    %v543 = vunpack.c.h.b16 %v68
    %v544 = vunpack.c.l.b16 %v69
    %v545 = vunpack.c.h.b16 %v69
    %v546 = vunpack.c.l.b16 %v70
    %v547 = vunpack.c.h.b16 %v70
    %v548 = vunpack.c.l.b16 %v71
    %v549 = vunpack.c.h.b16 %v71
    %v550 = vunpack.c.l.b16 %v72
    %v551 = vunpack.c.h.b16 %v72
    %v552 = vunpack.c.l.b16 %v73
    %v553 = vunpack.c.h.b16 %v73
    %v554 = vunpack.c.l.b16 %v74
    %v555 = vunpack.c.h.b16 %v74
    %v556 = vunpack.c.l.b16 %v75
    %v557 = vunpack.c.h.b16 %v75
    %v558 = vunpack.c.l.b16 %v76
    %v559 = vunpack.c.h.b16 %v76
    %v560 = vunpack.c.l.b16 %v77
    %v561 = vunpack.c.h.b16 %v77
    %v562 = vunpack.c.l.b16 %v78
    %v563 = vunpack.c.h.b16 %v78
    %v564 = vunpack.c.l.b16 %v79
    %v565 = vunpack.c.h.b16 %v79
    %v566 = vunpack.c.l.b16 %v80
    %v567 = vunpack.c.h.b16 %v80
    %v568 = vunpack.c.l.b16 %v81
    %v569 = vunpack.c.h.b16 %v81
    %v570 = vunpack.c.l.b16 %v82
    %v571 = vunpack.c.h.b16 %v82
    %v572 = vunpack.c.l.b16 %v83
    %v573 = vunpack.c.h.b16 %v83
    %v574 = vunpack.c.l.b16 %v84
    %v575 = vunpack.c.h.b16 %v84
    %v576 = vunpack.c.l.b16 %v85
    %v577 = vunpack.c.h.b16 %v85
    %v578 = vunpack.c.l.b16 %v86
    %v579 = vunpack.c.h.b16 %v86
    %v580 = vunpack.c.l.b16 %v87
    %v581 = vunpack.c.h.b16 %v87
    %v582 = vunpack.c.l.b16 %v88
    %v583 = vunpack.c.h.b16 %v88
    %v584 = vunpack.c.l.b16 %v89
    %v585 = vunpack.c.h.b16 %v89
    %v586 = vunpack.c.l.b16 %v90
    %v587 = vunpack.c.h.b16 %v90
    %v588 = vunpack.c.l.b16 %v91
    %v589 = vunpack.c.h.b16 %v91
    %v590 = vunpack.c.l.b16 %v92
    %v591 = vunpack.c.h.b16 %v92
    %v592 = vunpack.c.l.b16 %v93
    %v593 = vunpack.c.h.b16 %v93
    %v594 = vunpack.c.l.b16 %v94
    %v595 = vunpack.c.h.b16 %v94
    %v596 = vunpack.c.l.b16 %v95
    %v597 = vunpack.c.h.b16 %v95
    %v598 = vunpack.c.l.b16 %v96
    %v599 = vunpack.c.h.b16 %v96
    %v600 = vunpack.c.l.b16 %v97
    %v601 = vunpack.c.h.b16 %v97
    %v602 = vunpack.c.l.b16 %v98
    %v603 = vunpack.c.h.b16 %v98
    %v604 = vunpack.c.l.b16 %v99
    %v605 = vunpack.c.h.b16 %v99
    %v606 = vunpack.c.l.b16 %v100
    %v607 = vunpack.c.h.b16 %v100
    %v608 = vunpack.c.l.b16 %v101
    %v609 = vunpack.c.h.b16 %v101
    %v610 = vunpack.c.l.b16 %v102
    %v611 = vunpack.c.h.b16 %v102
    %v612 = vunpack.c.l.b16 %v103
    %v613 = vunpack.c.h.b16 %v103
    %v614 = vunpack.c.l.b16 %v104
    %v615 = vunpack.c.h.b16 %v104
    %v616 = vunpack.c.l.b16 %v105
    %v617 = vunpack.c.h.b16 %v105
    %v618 = vunpack.c.l.b16 %v106
    %v619 = vunpack.c.h.b16 %v106
    %v620 = vunpack.c.l.b16 %v107
    %v621 = vunpack.c.h.b16 %v107
    %v622 = vunpack.c.l.b16 %v108
    %v623 = vunpack.c.h.b16 %v108
    %v624 = vunpack.c.l.b16 %v109
    %v625 = vunpack.c.h.b16 %v109
    %v626 = vunpack.c.l.b16 %v110
    %v627 = vunpack.c.h.b16 %v110
    %v628 = vunpack.c.l.b16 %v111
    %v629 = vunpack.c.h.b16 %v111
    %v630 = vunpack.c.l.b16 %v112
    %v631 = vunpack.c.h.b16 %v112
    %v632 = vunpack.c.l.b16 %v113
    %v633 = vunpack.c.h.b16 %v113
    %v634 = vunpack.c.l.b16 %v114
    %v635 = vunpack.c.h.b16 %v114
    %v636 = vunpack.c.l.b16 %v115
    %v637 = vunpack.c.h.b16 %v115
    %v638 = vunpack.c.l.b16 %v116
    %v639 = vunpack.c.h.b16 %v116
    %v640 = vunpack.c.l.b16 %v117
    %v641 = vunpack.c.h.b16 %v117
    %v642 = vunpack.c.l.b16 %v118
    %v643 = vunpack.c.h.b16 %v118
    %v644 = vunpack.c.l.b16 %v119
    %v645 = vunpack.c.h.b16 %v119
    %v646 = vunpack.c.l.b16 %v120
    %v647 = vunpack.c.h.b16 %v120
    %v648 = vunpack.c.l.b16 %v121
    %v649 = vunpack.c.h.b16 %v121
    %v650 = vunpack.c.l.b16 %v122
    %v651 = vunpack.c.h.b16 %v122
    %v652 = vunpack.c.l.b16 %v123
    %v653 = vunpack.c.h.b16 %v123
    %v654 = vunpack.c.l.b16 %v124
    %v655 = vunpack.c.h.b16 %v124
    %v656 = vunpack.c.l.b16 %v125
    %v657 = vunpack.c.h.b16 %v125
    %v658 = vunpack.c.l.b16 %v126
    %v659 = vunpack.c.h.b16 %v126
    %v660 = vunpack.c.l.b16 %v127
    %v661 = vunpack.c.h.b16 %v127
    %v662 = vunpack.c.l.b16 %v128
    %v663 = vunpack.c.h.b16 %v128
    %v664 = vunpack.c.l.b16 %v129
    %v665 = vunpack.c.h.b16 %v129
    %v666 = vunpack.c.l.b16 %v130
    %v667 = vunpack.c.h.b16 %v130
    %v668 = vunpack.c.l.b16 %v131
    %v669 = vunpack.c.h.b16 %v131
    %v670 = vunpack.c.l.b16 %v132
    %v671 = vunpack.c.h.b16 %v132
    %v672 = vunpack.c.l.b16 %v133
    %v673 = vunpack.c.h.b16 %v133
    %v674 = vunpack.c.l.b16 %v134
    %v675 = vunpack.c.h.b16 %v134
    %v676 = vunpack.c.l.b16 %v135
    %v677 = vunpack.c.h.b16 %v135
    %v678 = vunpack.c.l.b16 %v136
    %v679 = vunpack.c.h.b16 %v136
    %v680 = vunpack.c.l.b16 %v137
    %v681 = vunpack.c.h.b16 %v137
    %v682 = vunpack.c.l.b16 %v138
    %v683 = vunpack.c.h.b16 %v138
    %v684 = vunpack.c.l.b16 %v139
    %v685 = vunpack.c.h.b16 %v139
    %v686 = vunpack.c.l.b16 %v140
    %v687 = vunpack.c.h.b16 %v140
    %v688 = vunpack.c.l.b16 %v141
    %v689 = vunpack.c.h.b16 %v141
    %v690 = vunpack.c.l.b16 %v142
    %v691 = vunpack.c.h.b16 %v142
    %v692 = vunpack.c.l.b16 %v143
    %v693 = vunpack.c.h.b16 %v143
    %v694 = vunpack.c.l.b16 %v144
    %v695 = vunpack.c.h.b16 %v144
    %v696 = vunpack.c.l.b16 %v145
    %v697 = vunpack.c.h.b16 %v145
    %v698 = vunpack.c.l.b16 %v146
    %v699 = vunpack.c.h.b16 %v146
    %v700 = vunpack.c.l.b16 %v147
    %v701 = vunpack.c.h.b16 %v147
    %v702 = vunpack.c.l.b16 %v148
    %v703 = vunpack.c.h.b16 %v148
    %v704 = vunpack.c.l.b16 %v149
    %v705 = vunpack.c.h.b16 %v149
    %v706 = vunpack.c.l.b16 %v150
    %v707 = vunpack.c.h.b16 %v150
    %v708 = vunpack.c.l.b16 %v151
    %v709 = vunpack.c.h.b16 %v151
    %v710 = vunpack.c.l.b16 %v152
    %v711 = vunpack.c.h.b16 %v152
    %v712 = vunpack.c.l.b16 %v153
    %v713 = vunpack.c.h.b16 %v153
    %v714 = vunpack.c.l.b16 %v154
    %v715 = vunpack.c.h.b16 %v154
    %v716 = vunpack.c.l.b16 %v155
    %v717 = vunpack.c.h.b16 %v155
    %v718 = vunpack.c.l.b16 %v156
    %v719 = vunpack.c.h.b16 %v156
    %v720 = vunpack.c.l.b16 %v157
    %v721 = vunpack.c.h.b16 %v157
    %v722 = vunpack.c.l.b16 %v158
    %v723 = vunpack.c.h.b16 %v158
    %v724 = vunpack.c.l.b16 %v159
    %v725 = vunpack.c.h.b16 %v159
    %v726 = vunpack.c.l.b16 %v160
    %v727 = vunpack.c.h.b16 %v160
    %v728 = vunpack.c.l.b16 %v161
    %v729 = vunpack.c.h.b16 %v161
    %v730 = vunpack.c.l.b16 %v162
    %v731 = vunpack.c.h.b16 %v162
    %v732 = vunpack.c.l.b16 %v163
    %v733 = vunpack.c.h.b16 %v163
    %v734 = vunpack.c.l.b16 %v164
    %v735 = vunpack.c.h.b16 %v164
    %v736 = vunpack.c.l.b16 %v165
    %v737 = vunpack.c.h.b16 %v165
    %v738 = vunpack.c.l.b16 %v166
    %v739 = vunpack.c.h.b16 %v166
    %v740 = vunpack.c.l.b16 %v167
    %v741 = vunpack.c.h.b16 %v167
    %v742 = vunpack.c.l.b16 %v168
    %v743 = vunpack.c.h.b16 %v168
    %v744 = vunpack.c.l.b16 %v169
    %v745 = vunpack.c.h.b16 %v169
    %v746 = vunpack.c.l.b16 %v170
    %v747 = vunpack.c.h.b16 %v170
    %v748 = vunpack.c.l.b16 %v171
    %v749 = vunpack.c.h.b16 %v171
    %v750 = vunpack.c.l.b16 %v172
    %v751 = vunpack.c.h.b16 %v172
    %v752 = vunpack.c.l.b16 %v173
    %v753 = vunpack.c.h.b16 %v173
    %v754 = vunpack.c.l.b16 %v174
    %v755 = vunpack.c.h.b16 %v174
    %v756 = vunpack.c.l.b16 %v175
    %v757 = vunpack.c.h.b16 %v175
    %v758 = vunpack.c.l.b16 %v176
    %v759 = vunpack.c.h.b16 %v176
    %v760 = vunpack.c.l.b16 %v177
    %v761 = vunpack.c.h.b16 %v177
    %v762 = vunpack.c.l.b16 %v178
    %v763 = vunpack.c.h.b16 %v178
    %v764 = vunpack.c.l.b16 %v179
    %v765 = vunpack.c.h.b16 %v179
    %v766 = vunpack.c.l.b16 %v180
    %v767 = vunpack.c.h.b16 %v180
    %v768 = vunpack.c.l.b16 %v181
    %v769 = vunpack.c.h.b16 %v181
    %v770 = vunpack.c.l.b16 %v182
    %v771 = vunpack.c.h.b16 %v182
    %v772 = vunpack.c.l.b16 %v183
    %v773 = vunpack.c.h.b16 %v183
    %v774 = vunpack.c.l.b16 %v184
    %v775 = vunpack.c.h.b16 %v184
    %v776 = vunpack.c.l.b16 %v185
    %v777 = vunpack.c.h.b16 %v185
    %v778 = vunpack.c.l.b16 %v186
    %v779 = vunpack.c.h.b16 %v186
    %v780 = vunpack.c.l.b16 %v187
    %v781 = vunpack.c.h.b16 %v187
    %v782 = vunpack.c.l.b16 %v188
    %v783 = vunpack.c.h.b16 %v188
    %v784 = vunpack.c.l.b16 %v189
    %v785 = vunpack.c.h.b16 %v189
    %v786 = vunpack.c.l.b16 %v190
    %v787 = vunpack.c.h.b16 %v190
    %v788 = vunpack.c.l.b16 %v191
    %v789 = vunpack.c.h.b16 %v191
    %v790 = vunpack.c.l.b16 %v192
    %v791 = vunpack.c.h.b16 %v192
    %v792 = vunpack.c.l.b16 %v193
    %v793 = vunpack.c.h.b16 %v193
    %v794 = vunpack.c.l.b16 %v194
    %v795 = vunpack.c.h.b16 %v194
    %v796 = vunpack.c.l.b16 %v195
    %v797 = vunpack.c.h.b16 %v195
    %v798 = vunpack.c.l.b16 %v196
    %v799 = vunpack.c.h.b16 %v196
    %v800 = vunpack.c.l.b16 %v197
    %v801 = vunpack.c.h.b16 %v197
    %v802 = vunpack.c.l.b16 %v198
    %v803 = vunpack.c.h.b16 %v198
    %v804 = vunpack.c.l.b16 %v199
    %v805 = vunpack.c.h.b16 %v199
    %v806 = vunpack.c.l.b16 %v200
    %v807 = vunpack.c.h.b16 %v200
    %v808 = vunpack.c.l.b16 %v201
    %v809 = vunpack.c.h.b16 %v201
    %v810 = vunpack.c.l.b16 %v202
    %v811 = vunpack.c.h.b16 %v202
    %v812 = vunpack.c.l.b16 %v203
    %v813 = vunpack.c.h.b16 %v203
    %v814 = vunpack.c.l.b16 %v204
    %v815 = vunpack.c.h.b16 %v204
    %v816 = vunpack.c.l.b16 %v205
    %v817 = vunpack.c.h.b16 %v205
    %v818 = vunpack.c.l.b16 %v206
    %v819 = vunpack.c.h.b16 %v206
    %v820 = vunpack.c.l.b16 %v207
    %v821 = vunpack.c.h.b16 %v207
    %v822 = vunpack.c.l.b16 %v208
    %v823 = vunpack.c.h.b16 %v208
    %v824 = vunpack.c.l.b16 %v209
    %v825 = vunpack.c.h.b16 %v209
    %v826 = vunpack.c.l.b16 %v210
    %v827 = vunpack.c.h.b16 %v210
    %v828 = vunpack.c.l.b16 %v211
    %v829 = vunpack.c.h.b16 %v211
    %v830 = vunpack.c.l.b16 %v212
    %v831 = vunpack.c.h.b16 %v212
    %v832 = vunpack.c.l.b16 %v213
    %v833 = vunpack.c.h.b16 %v213
    %v834 = vunpack.c.l.b16 %v214
    %v835 = vunpack.c.h.b16 %v214
    %v836 = vunpack.c.l.b16 %v215
    %v837 = vunpack.c.h.b16 %v215
    %v838 = vunpack.c.l.b16 %v216
    %v839 = vunpack.c.h.b16 %v216
    %v840 = vunpack.c.l.b16 %v217
    %v841 = vunpack.c.h.b16 %v217
    %v842 = vunpack.c.l.b16 %v218
    %v843 = vunpack.c.h.b16 %v218
    %v844 = vunpack.c.l.b16 %v219
    %v845 = vunpack.c.h.b16 %v219
    %v846 = vunpack.c.l.b16 %v220
    %v847 = vunpack.c.h.b16 %v220
    %v848 = vunpack.c.l.b16 %v221
    %v849 = vunpack.c.h.b16 %v221
    %v850 = vunpack.c.l.b16 %v222
    %v851 = vunpack.c.h.b16 %v222
    %v852 = vunpack.c.l.b16 %v223
    %v853 = vunpack.c.h.b16 %v223
    %v854 = vunpack.c.l.b16 %v224
    %v855 = vunpack.c.h.b16 %v224
    %v856 = vunpack.c.l.b16 %v225
    %v857 = vunpack.c.h.b16 %v225
    %v858 = vunpack.c.l.b16 %v226
    %v859 = vunpack.c.h.b16 %v226
    %v860 = vunpack.c.l.b16 %v227
    %v861 = vunpack.c.h.b16 %v227
    %v862 = vunpack.c.l.b16 %v228
    %v863 = vunpack.c.h.b16 %v228
    %v864 = vunpack.c.l.b16 %v229
    %v865 = vunpack.c.h.b16 %v229
    %v866 = vunpack.c.l.b16 %v230
    %v867 = vunpack.c.h.b16 %v230
    %v868 = vunpack.c.l.b16 %v231
    %v869 = vunpack.c.h.b16 %v231
    %v870 = vunpack.c.l.b16 %v232
    %v871 = vunpack.c.h.b16 %v232
    %v872 = vunpack.c.l.b16 %v233
    %v873 = vunpack.c.h.b16 %v233
    %v874 = vunpack.c.l.b16 %v234
    %v875 = vunpack.c.h.b16 %v234
    %v876 = vunpack.c.l.b16 %v235
    %v877 = vunpack.c.h.b16 %v235
    %v878 = vunpack.c.l.b16 %v236
    %v879 = vunpack.c.h.b16 %v236
    %v880 = vunpack.c.l.b16 %v237
    %v881 = vunpack.c.h.b16 %v237
    %v882 = vunpack.c.l.b16 %v238
    %v883 = vunpack.c.h.b16 %v238
    %v884 = vunpack.c.l.b16 %v239
    %v885 = vunpack.c.h.b16 %v239
    %v886 = vunpack.c.l.b16 %v240
    %v887 = vunpack.c.h.b16 %v240
    %v888 = vunpack.c.l.b16 %v241
    %v889 = vunpack.c.h.b16 %v241
    %v890 = vunpack.c.l.b16 %v242
    %v891 = vunpack.c.h.b16 %v242
    %v892 = vunpack.c.l.b16 %v243
    %v893 = vunpack.c.h.b16 %v243
    %v894 = vunpack.c.l.b16 %v244
    %v895 = vunpack.c.h.b16 %v244
    %v896 = vunpack.c.l.b16 %v245
    %v897 = vunpack.c.h.b16 %v245
    %v898 = vunpack.c.l.b16 %v246
    %v899 = vunpack.c.h.b16 %v246
    %v900 = vunpack.c.l.b16 %v247
    %v901 = vunpack.c.h.b16 %v247
    %v902 = vunpack.c.l.b16 %v248
    %v903 = vunpack.c.h.b16 %v248
    %v904 = vunpack.c.l.b16 %v249
    %v905 = vunpack.c.h.b16 %v249
    %v906 = vunpack.c.l.b16 %v250
    %v907 = vunpack.c.h.b16 %v250
    %v908 = vunpack.c.l.b16 %v251
    %v909 = vunpack.c.h.b16 %v251
    %v910 = vunpack.c.l.b16 %v252
    %v911 = vunpack.c.h.b16 %v252
    %v912 = vunpack.c.l.b16 %v253
    %v913 = vunpack.c.h.b16 %v253
    %v914 = vunpack.c.l.b16 %v254
    %v915 = vunpack.c.h.b16 %v254
    %v916 = vunpack.c.l.b16 %v255
    %v917 = vunpack.c.h.b16 %v255
    %v918 = vunpack.c.l.b16 %v256
    %v919 = vunpack.c.h.b16 %v256
    %v920 = vunpack.c.l.b16 %v257
    %v921 = vunpack.c.h.b16 %v257
    %v922 = vunpack.c.l.b16 %v258
    %v923 = vunpack.c.h.b16 %v258
    %v924 = vpack.c.b16 %v536, %v532
    %v925 = vpack.c.b16 %v537, %v533
    %v926 = vpack.c.b16 %v538, %v534
    %v927 = vpack.c.b16 %v539, %v535
    %v928 = vpack.c.b16 %v544, %v540
    %v929 = vpack.c.b16 %v545, %v541
    %v930 = vpack.c.b16 %v546, %v542
    %v931 = vpack.c.b16 %v547, %v543
    %v932 = vpack.c.b16 %v552, %v548
    %v933 = vpack.c.b16 %v553, %v549
    %v934 = vpack.c.b16 %v554, %v550
    %v935 = vpack.c.b16 %v555, %v551
    %v936 = vpack.c.b16 %v560, %v556
    %v937 = vpack.c.b16 %v561, %v557
    %v938 = vpack.c.b16 %v562, %v558
    %v939 = vpack.c.b16 %v563, %v559
    %v940 = vpack.c.b16 %v568, %v564
    %v941 = vpack.c.b16 %v569, %v565
    %v942 = vpack.c.b16 %v570, %v566
    %v943 = vpack.c.b16 %v571, %v567
    %v944 = vpack.c.b16 %v576, %v572
    %v945 = vpack.c.b16 %v577, %v573
    %v946 = vpack.c.b16 %v578, %v574
    %v947 = vpack.c.b16 %v579, %v575
    %v948 = vpack.c.b16 %v584, %v580
    %v949 = vpack.c.b16 %v585, %v581
    %v950 = vpack.c.b16 %v586, %v582
    %v951 = vpack.c.b16 %v587, %v583
    %v952 = vpack.c.b16 %v592, %v588
    %v953 = vpack.c.b16 %v593, %v589
    %v954 = vpack.c.b16 %v594, %v590
    %v955 = vpack.c.b16 %v595, %v591
    %v956 = vpack.c.b16 %v600, %v596
    %v957 = vpack.c.b16 %v601, %v597
    %v958 = vpack.c.b16 %v602, %v598
    %v959 = vpack.c.b16 %v603, %v599
    %v960 = vpack.c.b16 %v608, %v604
    %v961 = vpack.c.b16 %v609, %v605
    %v962 = vpack.c.b16 %v610, %v606
    %v963 = vpack.c.b16 %v611, %v607
    %v964 = vpack.c.b16 %v616, %v612
    %v965 = vpack.c.b16 %v617, %v613
    %v966 = vpack.c.b16 %v618, %v614
    %v967 = vpack.c.b16 %v619, %v615
    %v968 = vpack.c.b16 %v624, %v620
    %v969 = vpack.c.b16 %v625, %v621
    %v970 = vpack.c.b16 %v626, %v622
    %v971 = vpack.c.b16 %v627, %v623
    %v972 = vpack.c.b16 %v632, %v628
    %v973 = vpack.c.b16 %v633, %v629
    %v974 = vpack.c.b16 %v634, %v630
    %v975 = vpack.c.b16 %v635, %v631
    %v976 = vpack.c.b16 %v640, %v636
    %v977 = vpack.c.b16 %v641, %v637
    %v978 = vpack.c.b16 %v642, %v638
    %v979 = vpack.c.b16 %v643, %v639
    %v980 = vpack.c.b16 %v648, %v644
    %v981 = vpack.c.b16 %v649, %v645
    %v982 = vpack.c.b16 %v650, %v646
    %v983 = vpack.c.b16 %v651, %v647
    %v984 = vpack.c.b16 %v656, %v652
    %v985 = vpack.c.b16 %v657, %v653
    %v986 = vpack.c.b16 %v658, %v654
    %v987 = vpack.c.b16 %v659, %v655
    %v988 = vpack.c.b16 %v664, %v660
    %v989 = vpack.c.b16 %v665, %v661
    %v990 = vpack.c.b16 %v666, %v662
    %v991 = vpack.c.b16 %v667, %v663
    %v992 = vpack.c.b16 %v672, %v668
    %v993 = vpack.c.b16 %v673, %v669
    %v994 = vpack.c.b16 %v674, %v670
    %v995 = vpack.c.b16 %v675, %v671
    %v996 = vpack.c.b16 %v680, %v676
    %v997 = vpack.c.b16 %v681, %v677
    %v998 = vpack.c.b16 %v682, %v678
    %v999 = vpack.c.b16 %v683, %v679
    %v1000 = vpack.c.b16 %v688, %v684
    %v1001 = vpack.c.b16 %v689, %v685
    %v1002 = vpack.c.b16 %v690, %v686
    %v1003 = vpack.c.b16 %v691, %v687
    %v1004 = vpack.c.b16 %v696, %v692
    %v1005 = vpack.c.b16 %v697, %v693
    %v1006 = vpack.c.b16 %v698, %v694
    %v1007 = vpack.c.b16 %v699, %v695
    %v1008 = vpack.c.b16 %v704, %v700
    %v1009 = vpack.c.b16 %v705, %v701
    %v1010 = vpack.c.b16 %v706, %v702
    %v1011 = vpack.c.b16 %v707, %v703
    %v1012 = vpack.c.b16 %v712, %v708
    %v1013 = vpack.c.b16 %v713, %v709
    %v1014 = vpack.c.b16 %v714, %v710
    %v1015 = vpack.c.b16 %v715, %v711
    %v1016 = vpack.c.b16 %v720, %v716
    %v1017 = vpack.c.b16 %v721, %v717
    %v1018 = vpack.c.b16 %v722, %v718
    %v1019 = vpack.c.b16 %v723, %v719
    %v1020 = vpack.c.b16 %v728, %v724
    %v1021 = vpack.c.b16 %v729, %v725
    %v1022 = vpack.c.b16 %v730, %v726
    %v1023 = vpack.c.b16 %v731, %v727
    %v1024 = vpack.c.b16 %v736, %v732
    %v1025 = vpack.c.b16 %v737, %v733
    %v1026 = vpack.c.b16 %v738, %v734
    %v1027 = vpack.c.b16 %v739, %v735
    %v1028 = vpack.c.b16 %v744, %v740
    %v1029 = vpack.c.b16 %v745, %v741
    %v1030 = vpack.c.b16 %v746, %v742
    %v1031 = vpack.c.b16 %v747, %v743
    %v1032 = vpack.c.b16 %v752, %v748
    %v1033 = vpack.c.b16 %v753, %v749
    %v1034 = vpack.c.b16 %v754, %v750
    %v1035 = vpack.c.b16 %v755, %v751
    %v1036 = vpack.c.b16 %v760, %v756
    %v1037 = vpack.c.b16 %v761, %v757
    %v1038 = vpack.c.b16 %v762, %v758
    %v1039 = vpack.c.b16 %v763, %v759
    %v1040 = vpack.c.b16 %v768, %v764
    %v1041 = vpack.c.b16 %v769, %v765
    %v1042 = vpack.c.b16 %v770, %v766
    %v1043 = vpack.c.b16 %v771, %v767
    %v1044 = vpack.c.b16 %v776, %v772
    %v1045 = vpack.c.b16 %v777, %v773
    %v1046 = vpack.c.b16 %v778, %v774
    %v1047 = vpack.c.b16 %v779, %v775
    %v1048 = vpack.c.b16 %v784, %v780
    %v1049 = vpack.c.b16 %v785, %v781
    %v1050 = vpack.c.b16 %v786, %v782
    %v1051 = vpack.c.b16 %v787, %v783
    %v1052 = vpack.c.b16 %v792, %v788
    %v1053 = vpack.c.b16 %v793, %v789
    %v1054 = vpack.c.b16 %v794, %v790
    %v1055 = vpack.c.b16 %v795, %v791
    %v1056 = vpack.c.b16 %v800, %v796
    %v1057 = vpack.c.b16 %v801, %v797
    %v1058 = vpack.c.b16 %v802, %v798
    %v1059 = vpack.c.b16 %v803, %v799
    %v1060 = vpack.c.b16 %v808, %v804
    %v1061 = vpack.c.b16 %v809, %v805
    %v1062 = vpack.c.b16 %v810, %v806
    %v1063 = vpack.c.b16 %v811, %v807
    %v1064 = vpack.c.b16 %v816, %v812
    %v1065 = vpack.c.b16 %v817, %v813
    %v1066 = vpack.c.b16 %v818, %v814
    %v1067 = vpack.c.b16 %v819, %v815
    %v1068 = vpack.c.b16 %v824, %v820
    %v1069 = vpack.c.b16 %v825, %v821
    %v1070 = vpack.c.b16 %v826, %v822
    %v1071 = vpack.c.b16 %v827, %v823
    %v1072 = vpack.c.b16 %v832, %v828
    %v1073 = vpack.c.b16 %v833, %v829
    %v1074 = vpack.c.b16 %v834, %v830
    %v1075 = vpack.c.b16 %v835, %v831
    %v1076 = vpack.c.b16 %v840, %v836
    %v1077 = vpack.c.b16 %v841, %v837
    %v1078 = vpack.c.b16 %v842, %v838
    %v1079 = vpack.c.b16 %v843, %v839
    %v1080 = vpack.c.b16 %v848, %v844
    %v1081 = vpack.c.b16 %v849, %v845
    %v1082 = vpack.c.b16 %v850, %v846
    %v1083 = vpack.c.b16 %v851, %v847
    %v1084 = vpack.c.b16 %v856, %v852
    %v1085 = vpack.c.b16 %v857, %v853
    %v1086 = vpack.c.b16 %v858, %v854
    %v1087 = vpack.c.b16 %v859, %v855
    %v1088 = vpack.c.b16 %v864, %v860
    %v1089 = vpack.c.b16 %v865, %v861
    %v1090 = vpack.c.b16 %v866, %v862
    %v1091 = vpack.c.b16 %v867, %v863
    %v1092 = vpack.c.b16 %v872, %v868
    %v1093 = vpack.c.b16 %v873, %v869
    %v1094 = vpack.c.b16 %v874, %v870
    %v1095 = vpack.c.b16 %v875, %v871
    %v1096 = vpack.c.b16 %v880, %v876
    %v1097 = vpack.c.b16 %v881, %v877
    %v1098 = vpack.c.b16 %v882, %v878
    %v1099 = vpack.c.b16 %v883, %v879
    %v1100 = vpack.c.b16 %v888, %v884
    %v1101 = vpack.c.b16 %v889, %v885
    %v1102 = vpack.c.b16 %v890, %v886
    %v1103 = vpack.c.b16 %v891, %v887
    %v1104 = vpack.c.b16 %v896, %v892
    %v1105 = vpack.c.b16 %v897, %v893
    %v1106 = vpack.c.b16 %v898, %v894
    %v1107 = vpack.c.b16 %v899, %v895
    %v1108 = vpack.c.b16 %v904, %v900
    %v1109 = vpack.c.b16 %v905, %v901
    %v1110 = vpack.c.b16 %v906, %v902
    %v1111 = vpack.c.b16 %v907, %v903
    %v1112 = vpack.c.b16 %v912, %v908
    %v1113 = vpack.c.b16 %v913, %v909
    %v1114 = vpack.c.b16 %v914, %v910
    %v1115 = vpack.c.b16 %v915, %v911
    %v1116 = vpack.c.b16 %v920, %v916
    %v1117 = vpack.c.b16 %v921, %v917
    %v1118 = vpack.c.b16 %v922, %v918
    %v1119 = vpack.c.b16 %v923, %v919
    %vm1316 = vcmask 130048
    %v1318 = vsel %vm1316, %v328, 0
    %1320 = vmatprep.subr.bf16.mxu0 %v925
    %1321 = vmatpush1.bf16.msra.mxu0 %v924
    %1322 = vmatprep.subr.bf16.mxu0 %v929
    %1323 = vmatpush1.bf16.msra.mxu0 %v928
    %1324 = vmatprep.subr.bf16.mxu0 %v933
    %1325 = vmatpush1.bf16.msra.mxu0 %v932
    %1326 = vmatprep.subr.bf16.mxu0 %v937
    %1327 = vmatpush1.bf16.msra.mxu0 %v936
    %1328 = vmatprep.subr.bf16.mxu0 %v941
    %1329 = vmatpush1.bf16.msra.mxu0 %v940
    %1330 = vmatprep.subr.bf16.mxu0 %v945
    %1331 = vmatpush1.bf16.msra.mxu0 %v944
    %1332 = vmatprep.subr.bf16.mxu0 %v949
    %1333 = vmatpush1.bf16.msra.mxu0 %v948
    %1334 = vmatprep.subr.bf16.mxu0 %v953
    %1335 = vmatpush1.bf16.msra.mxu0 %v952
    %1336 = vmatprep.subr.bf16.mxu0 %v957
    %1337 = vmatpush1.bf16.msra.mxu0 %v956
    %1338 = vmatprep.subr.bf16.mxu0 %v961
    %1339 = vmatpush1.bf16.msra.mxu0 %v960
    %1340 = vmatprep.subr.bf16.mxu0 %v965
    %1341 = vmatpush1.bf16.msra.mxu0 %v964
    %1342 = vmatprep.subr.bf16.mxu0 %v969
    %1343 = vmatpush1.bf16.msra.mxu0 %v968
    %1344 = vmatprep.subr.bf16.mxu0 %v973
    %1345 = vmatpush1.bf16.msra.mxu0 %v972
    %1346 = vmatprep.subr.bf16.mxu0 %v977
    %1347 = vmatpush1.bf16.msra.mxu0 %v976
    %1348 = vmatprep.subr.bf16.mxu0 %v981
    %1349 = vmatpush1.bf16.msra.mxu0 %v980
    %1350 = vmatprep.subr.bf16.mxu0 %v985
    %1351 = vmatpush1.bf16.msra.mxu0 %v984
    %1352 = vmatprep.mubr.bf16.mxu0 %v319
    %1353 = vmatmul.mubr.bf16.gmra.mrb[0].mxu0 %v305
    %v1354 = vpop.f32.mrb[0].mxu0
    %v1355 = vadd.f32 %v264, %v1354
    %v1356 = vpop.f32.mrb[0].mxu0
    %v1357 = vadd.f32 %v268, %v1356
    %v1358 = vpop.f32.mrb[0].mxu0
    %v1359 = vpop.f32.mrb[0].mxu0
    %1360 = vdwg.mxu0
    %1361 = vmatprep.subr.bf16.mxu0 %v989
    %1362 = vmatpush1.bf16.msra.mxu0 %v988
    %1363 = vmatprep.subr.bf16.mxu0 %v993
    %1364 = vmatpush1.bf16.msra.mxu0 %v992
    %1365 = vmatprep.subr.bf16.mxu0 %v997
    %1366 = vmatpush1.bf16.msra.mxu0 %v996
    %1367 = vmatprep.subr.bf16.mxu0 %v1001
    %1368 = vmatpush1.bf16.msra.mxu0 %v1000
    %1369 = vmatprep.subr.bf16.mxu0 %v1005
    %1370 = vmatpush1.bf16.msra.mxu0 %v1004
    %1371 = vmatprep.subr.bf16.mxu0 %v1009
    %1372 = vmatpush1.bf16.msra.mxu0 %v1008
    %1373 = vmatprep.subr.bf16.mxu0 %v1013
    %1374 = vmatpush1.bf16.msra.mxu0 %v1012
    %1375 = vmatprep.subr.bf16.mxu0 %v1017
    %1376 = vmatpush1.bf16.msra.mxu0 %v1016
    %1377 = vmatprep.subr.bf16.mxu0 %v1021
    %1378 = vmatpush1.bf16.msra.mxu0 %v1020
    %1379 = vmatprep.subr.bf16.mxu0 %v1025
    %1380 = vmatpush1.bf16.msra.mxu0 %v1024
    %1381 = vmatprep.subr.bf16.mxu0 %v1029
    %1382 = vmatpush1.bf16.msra.mxu0 %v1028
    %1383 = vmatprep.subr.bf16.mxu0 %v1033
    %1384 = vmatpush1.bf16.msra.mxu0 %v1032
    %1385 = vmatprep.subr.bf16.mxu0 %v1037
    %1386 = vmatpush1.bf16.msra.mxu0 %v1036
    %1387 = vmatprep.subr.bf16.mxu0 %v1041
    %1388 = vmatpush1.bf16.msra.mxu0 %v1040
    %1389 = vmatprep.subr.bf16.mxu0 %v1045
    %1390 = vmatpush1.bf16.msra.mxu0 %v1044
    %1391 = vmatprep.subr.bf16.mxu0 %v1049
    %1392 = vmatpush1.bf16.msra.mxu0 %v1048
    %1393 = vmatprep.mubr.bf16.mxu0 %v329
    %1394 = vmatmul.mubr.bf16.gmra.mrb[0].mxu0 %v327
    %v1395 = vpop.f32.mrb[0].mxu0
    %v1396 = vadd.f32 %v1355, %v1395
    %v1397 = vpop.f32.mrb[0].mxu0
    %v1398 = vadd.f32 %v1357, %v1397
    %v1399 = vpop.f32.mrb[0].mxu0
    %v1400 = vpop.f32.mrb[0].mxu0
    %1401 = vdwg.mxu0
    %1402 = vmatprep.subr.bf16.mxu0 %v1053
    %1403 = vmatpush1.bf16.msra.mxu0 %v1052
    %1404 = vmatprep.subr.bf16.mxu0 %v1057
    %1405 = vmatpush1.bf16.msra.mxu0 %v1056
    %1406 = vmatprep.subr.bf16.mxu0 %v1061
    %1407 = vmatpush1.bf16.msra.mxu0 %v1060
    %1408 = vmatprep.subr.bf16.mxu0 %v1065
    %1409 = vmatpush1.bf16.msra.mxu0 %v1064
    %1410 = vmatprep.subr.bf16.mxu0 %v1069
    %1411 = vmatpush1.bf16.msra.mxu0 %v1068
    %1412 = vmatprep.subr.bf16.mxu0 %v1073
    %1413 = vmatpush1.bf16.msra.mxu0 %v1072
    %1414 = vmatprep.subr.bf16.mxu0 %v1077
    %1415 = vmatpush1.bf16.msra.mxu0 %v1076
    %1416 = vmatprep.subr.bf16.mxu0 %v1081
    %1417 = vmatpush1.bf16.msra.mxu0 %v1080
    %1418 = vmatprep.subr.bf16.mxu0 %v1085
    %1419 = vmatpush1.bf16.msra.mxu0 %v1084
    %1420 = vmatprep.subr.bf16.mxu0 %v1089
    %1421 = vmatpush1.bf16.msra.mxu0 %v1088
    %1422 = vmatprep.subr.bf16.mxu0 %v1093
    %1423 = vmatpush1.bf16.msra.mxu0 %v1092
    %1424 = vmatprep.subr.bf16.mxu0 %v1097
    %1425 = vmatpush1.bf16.msra.mxu0 %v1096
    %1426 = vmatprep.subr.bf16.mxu0 %v1101
    %1427 = vmatpush1.bf16.msra.mxu0 %v1100
    %1428 = vmatprep.subr.bf16.mxu0 %v1105
    %1429 = vmatpush1.bf16.msra.mxu0 %v1104
    %1430 = vmatprep.subr.bf16.mxu0 %v1109
    %1431 = vmatpush1.bf16.msra.mxu0 %v1108
    %1432 = vmatprep.subr.bf16.mxu0 %v1113
    %1433 = vmatpush1.bf16.msra.mxu0 %v1112
    %1434 = vmatprep.mubr.bf16.mxu0 %v326
    %1435 = vmatmul.mubr.bf16.gmra.mrb[0].mxu0 %v312
    %v1436 = vpop.f32.mrb[0].mxu0
    %v1437 = vadd.f32 %v1396, %v1436
    %v1438 = vpop.f32.mrb[0].mxu0
    %v1439 = vadd.f32 %v1398, %v1438
    %v1440 = vpop.f32.mrb[0].mxu0
    %v1441 = vpop.f32.mrb[0].mxu0
    %1442 = vdwg.mxu0
    %1443 = vmatprep.subr.bf16.mxu0 %v1117
    %1444 = vmatpush1.bf16.msra.mxu0 %v1116
    %1445 = vmatprep.subr.bf16.mxu0 0
    %1446 = vmatpush1.bf16.msra.mxu0 0
    %1447 = vmatprep.subr.bf16.mxu0 0
    %1448 = vmatpush1.bf16.msra.mxu0 0
    %1449 = vmatprep.subr.bf16.mxu0 0
    %1450 = vmatpush1.bf16.msra.mxu0 0
    %1451 = vmatprep.subr.bf16.mxu0 0
    %1452 = vmatpush1.bf16.msra.mxu0 0
    %1453 = vmatprep.subr.bf16.mxu0 0
    %1454 = vmatpush1.bf16.msra.mxu0 0
    %1455 = vmatprep.subr.bf16.mxu0 0
    %1456 = vmatpush1.bf16.msra.mxu0 0
    %1457 = vmatprep.subr.bf16.mxu0 0
    %1458 = vmatpush1.bf16.msra.mxu0 0
    %1459 = vmatprep.subr.bf16.mxu0 0
    %1460 = vmatpush1.bf16.msra.mxu0 0
    %1461 = vmatprep.subr.bf16.mxu0 0
    %1462 = vmatpush1.bf16.msra.mxu0 0
    %1463 = vmatprep.subr.bf16.mxu0 0
    %1464 = vmatpush1.bf16.msra.mxu0 0
    %1465 = vmatprep.subr.bf16.mxu0 0
    %1466 = vmatpush1.bf16.msra.mxu0 0
    %1467 = vmatprep.subr.bf16.mxu0 0
    %1468 = vmatpush1.bf16.msra.mxu0 0
    %1469 = vmatprep.subr.bf16.mxu0 0
    %1470 = vmatpush1.bf16.msra.mxu0 0
    %1471 = vmatprep.subr.bf16.mxu0 0
    %1472 = vmatpush1.bf16.msra.mxu0 0
    %1473 = vmatprep.subr.bf16.mxu0 0
    %1474 = vmatpush1.bf16.msra.mxu0 0
    %1475 = vmatprep.mubr.bf16.mxu0 0
    %1476 = vmatmul.mubr.bf16.gmra.mrb[0].mxu0 %v1318
    %v1477 = vpop.f32.mrb[0].mxu0
    %v1478 = vadd.f32 %v1437, %v1477
    %v1479 = vpop.f32.mrb[0].mxu0
    %v1480 = vadd.f32 %v1439, %v1479
    %v1481 = vpop.f32.mrb[0].mxu0
    %v1482 = vpop.f32.mrb[0].mxu0
    %1483 = vdwg.mxu0
    %1484 = vmatprep.subr.bf16.mxu0 %v927
    %1485 = vmatpush1.bf16.msra.mxu0 %v926
    %1486 = vmatprep.subr.bf16.mxu0 %v931
    %1487 = vmatpush1.bf16.msra.mxu0 %v930
    %1488 = vmatprep.subr.bf16.mxu0 %v935
    %1489 = vmatpush1.bf16.msra.mxu0 %v934
    %1490 = vmatprep.subr.bf16.mxu0 %v939
    %1491 = vmatpush1.bf16.msra.mxu0 %v938
    %1492 = vmatprep.subr.bf16.mxu0 %v943
    %1493 = vmatpush1.bf16.msra.mxu0 %v942
    %1494 = vmatprep.subr.bf16.mxu0 %v947
    %1495 = vmatpush1.bf16.msra.mxu0 %v946
    %1496 = vmatprep.subr.bf16.mxu0 %v951
    %1497 = vmatpush1.bf16.msra.mxu0 %v950
    %1498 = vmatprep.subr.bf16.mxu0 %v955
    %1499 = vmatpush1.bf16.msra.mxu0 %v954
    %1500 = vmatprep.subr.bf16.mxu0 %v959
    %1501 = vmatpush1.bf16.msra.mxu0 %v958
    %1502 = vmatprep.subr.bf16.mxu0 %v963
    %1503 = vmatpush1.bf16.msra.mxu0 %v962
    %1504 = vmatprep.subr.bf16.mxu0 %v967
    %1505 = vmatpush1.bf16.msra.mxu0 %v966
    %1506 = vmatprep.subr.bf16.mxu0 %v971
    %1507 = vmatpush1.bf16.msra.mxu0 %v970
    %1508 = vmatprep.subr.bf16.mxu0 %v975
    %1509 = vmatpush1.bf16.msra.mxu0 %v974
    %1510 = vmatprep.subr.bf16.mxu0 %v979
    %1511 = vmatpush1.bf16.msra.mxu0 %v978
    %1512 = vmatprep.subr.bf16.mxu0 %v983
    %1513 = vmatpush1.bf16.msra.mxu0 %v982
    %1514 = vmatprep.subr.bf16.mxu0 %v987
    %1515 = vmatpush1.bf16.msra.mxu0 %v986
    %1516 = vmatprep.mubr.bf16.mxu0 %v319
    %1517 = vmatmul.mubr.bf16.gmra.mrb[0].mxu0 %v305
    %v1518 = vpop.f32.mrb[0].mxu0
    %v1519 = vadd.f32 %v272, %v1518
    %v1520 = vpop.f32.mrb[0].mxu0
    %v1521 = vadd.f32 %v276, %v1520
    %v1522 = vpop.f32.mrb[0].mxu0
    %v1523 = vpop.f32.mrb[0].mxu0
    %1524 = vdwg.mxu0
    %1525 = vmatprep.subr.bf16.mxu0 %v991
    %1526 = vmatpush1.bf16.msra.mxu0 %v990
    %1527 = vmatprep.subr.bf16.mxu0 %v995
    %1528 = vmatpush1.bf16.msra.mxu0 %v994
    %1529 = vmatprep.subr.bf16.mxu0 %v999
    %1530 = vmatpush1.bf16.msra.mxu0 %v998
    %1531 = vmatprep.subr.bf16.mxu0 %v1003
    %1532 = vmatpush1.bf16.msra.mxu0 %v1002
    %1533 = vmatprep.subr.bf16.mxu0 %v1007
    %1534 = vmatpush1.bf16.msra.mxu0 %v1006
    %1535 = vmatprep.subr.bf16.mxu0 %v1011
    %1536 = vmatpush1.bf16.msra.mxu0 %v1010
    %1537 = vmatprep.subr.bf16.mxu0 %v1015
    %1538 = vmatpush1.bf16.msra.mxu0 %v1014
    %1539 = vmatprep.subr.bf16.mxu0 %v1019
    %1540 = vmatpush1.bf16.msra.mxu0 %v1018
    %1541 = vmatprep.subr.bf16.mxu0 %v1023
    %1542 = vmatpush1.bf16.msra.mxu0 %v1022
    %1543 = vmatprep.subr.bf16.mxu0 %v1027
    %1544 = vmatpush1.bf16.msra.mxu0 %v1026
    %1545 = vmatprep.subr.bf16.mxu0 %v1031
    %1546 = vmatpush1.bf16.msra.mxu0 %v1030
    %1547 = vmatprep.subr.bf16.mxu0 %v1035
    %1548 = vmatpush1.bf16.msra.mxu0 %v1034
    %1549 = vmatprep.subr.bf16.mxu0 %v1039
    %1550 = vmatpush1.bf16.msra.mxu0 %v1038
    %1551 = vmatprep.subr.bf16.mxu0 %v1043
    %1552 = vmatpush1.bf16.msra.mxu0 %v1042
    %1553 = vmatprep.subr.bf16.mxu0 %v1047
    %1554 = vmatpush1.bf16.msra.mxu0 %v1046
    %1555 = vmatprep.subr.bf16.mxu0 %v1051
    %1556 = vmatpush1.bf16.msra.mxu0 %v1050
    %1557 = vmatprep.mubr.bf16.mxu0 %v329
    %1558 = vmatmul.mubr.bf16.gmra.mrb[0].mxu0 %v327
    %v1559 = vpop.f32.mrb[0].mxu0
    %v1560 = vadd.f32 %v1519, %v1559
    %v1561 = vpop.f32.mrb[0].mxu0
    %v1562 = vadd.f32 %v1521, %v1561
    %v1563 = vpop.f32.mrb[0].mxu0
    %v1564 = vpop.f32.mrb[0].mxu0
    %1565 = vdwg.mxu0
    %1566 = vmatprep.subr.bf16.mxu0 %v1055
    %1567 = vmatpush1.bf16.msra.mxu0 %v1054
    %1568 = vmatprep.subr.bf16.mxu0 %v1059
    %1569 = vmatpush1.bf16.msra.mxu0 %v1058
    %1570 = vmatprep.subr.bf16.mxu0 %v1063
    %1571 = vmatpush1.bf16.msra.mxu0 %v1062
    %1572 = vmatprep.subr.bf16.mxu0 %v1067
    %1573 = vmatpush1.bf16.msra.mxu0 %v1066
    %1574 = vmatprep.subr.bf16.mxu0 %v1071
    %1575 = vmatpush1.bf16.msra.mxu0 %v1070
    %1576 = vmatprep.subr.bf16.mxu0 %v1075
    %1577 = vmatpush1.bf16.msra.mxu0 %v1074
    %1578 = vmatprep.subr.bf16.mxu0 %v1079
    %1579 = vmatpush1.bf16.msra.mxu0 %v1078
    %1580 = vmatprep.subr.bf16.mxu0 %v1083
    %1581 = vmatpush1.bf16.msra.mxu0 %v1082
    %1582 = vmatprep.subr.bf16.mxu0 %v1087
    %1583 = vmatpush1.bf16.msra.mxu0 %v1086
    %1584 = vmatprep.subr.bf16.mxu0 %v1091
    %1585 = vmatpush1.bf16.msra.mxu0 %v1090
    %1586 = vmatprep.subr.bf16.mxu0 %v1095
    %1587 = vmatpush1.bf16.msra.mxu0 %v1094
    %1588 = vmatprep.subr.bf16.mxu0 %v1099
    %1589 = vmatpush1.bf16.msra.mxu0 %v1098
    %1590 = vmatprep.subr.bf16.mxu0 %v1103
    %1591 = vmatpush1.bf16.msra.mxu0 %v1102
    %1592 = vmatprep.subr.bf16.mxu0 %v1107
    %1593 = vmatpush1.bf16.msra.mxu0 %v1106
    %1594 = vmatprep.subr.bf16.mxu0 %v1111
    %1595 = vmatpush1.bf16.msra.mxu0 %v1110
    %1596 = vmatprep.subr.bf16.mxu0 %v1115
    %1597 = vmatpush1.bf16.msra.mxu0 %v1114
    %1598 = vmatprep.mubr.bf16.mxu0 %v326
    %1599 = vmatmul.mubr.bf16.gmra.mrb[0].mxu0 %v312
    %v1600 = vpop.f32.mrb[0].mxu0
    %v1601 = vadd.f32 %v1560, %v1600
    %v1602 = vpop.f32.mrb[0].mxu0
    %v1603 = vadd.f32 %v1562, %v1602
    %v1604 = vpop.f32.mrb[0].mxu0
    %v1605 = vpop.f32.mrb[0].mxu0
    %1606 = vdwg.mxu0
    %1607 = vmatprep.subr.bf16.mxu0 %v1119
    %1608 = vmatpush1.bf16.msra.mxu0 %v1118
    %1609 = vmatprep.subr.bf16.mxu0 0
    %1610 = vmatpush1.bf16.msra.mxu0 0
    %1611 = vmatprep.subr.bf16.mxu0 0
    %1612 = vmatpush1.bf16.msra.mxu0 0
    %1613 = vmatprep.subr.bf16.mxu0 0
    %1614 = vmatpush1.bf16.msra.mxu0 0
    %1615 = vmatprep.subr.bf16.mxu0 0
    %1616 = vmatpush1.bf16.msra.mxu0 0
    %1617 = vmatprep.subr.bf16.mxu0 0
    %1618 = vmatpush1.bf16.msra.mxu0 0
    %1619 = vmatprep.subr.bf16.mxu0 0
    %1620 = vmatpush1.bf16.msra.mxu0 0
    %1621 = vmatprep.subr.bf16.mxu0 0
    %1622 = vmatpush1.bf16.msra.mxu0 0
    %1623 = vmatprep.subr.bf16.mxu0 0
    %1624 = vmatpush1.bf16.msra.mxu0 0
    %1625 = vmatprep.subr.bf16.mxu0 0
    %1626 = vmatpush1.bf16.msra.mxu0 0
    %1627 = vmatprep.subr.bf16.mxu0 0
    %1628 = vmatpush1.bf16.msra.mxu0 0
    %1629 = vmatprep.subr.bf16.mxu0 0
    %1630 = vmatpush1.bf16.msra.mxu0 0
    %1631 = vmatprep.subr.bf16.mxu0 0
    %1632 = vmatpush1.bf16.msra.mxu0 0
    %1633 = vmatprep.subr.bf16.mxu0 0
    %1634 = vmatpush1.bf16.msra.mxu0 0
    %1635 = vmatprep.subr.bf16.mxu0 0
    %1636 = vmatpush1.bf16.msra.mxu0 0
    %1637 = vmatprep.subr.bf16.mxu0 0
    %1638 = vmatpush1.bf16.msra.mxu0 0
    %1639 = vmatprep.mubr.bf16.mxu0 0
    %1640 = vmatmul.mubr.bf16.gmra.mrb[0].mxu0 %v1318
    %v1641 = vpop.f32.mrb[0].mxu0
    %v1642 = vadd.f32 %v1601, %v1641
    %v1643 = vpop.f32.mrb[0].mxu0
    %v1644 = vadd.f32 %v1603, %v1643
    %v1645 = vpop.f32.mrb[0].mxu0
    %v1646 = vpop.f32.mrb[0].mxu0
    %1647 = vdwg.mxu0
    %v1648 = vmax.f32 %v1478, 0.0
    %v1649 = vmax.f32 %v1480, 0.0
    %v1650 = vmax.f32 %v1642, 0.0
    %v1651 = vmax.f32 %v1644, 0.0
    %v1652 = vpack.c.bf16 %v1648, %v1648
    %v1653 = vpack.c.bf16 %v1649, %v1649
    %v1654 = vpack.c.bf16 %v1650, %v1650
    %v1655 = vpack.c.bf16 %v1651, %v1651
    %v1656 = vld [vmem:[#allocation5] sm:$0xff]
    %v1657 = vld [vmem:[#allocation5 + $0x8] sm:$0xff]
    %v1658 = vld [vmem:[#allocation5 + $0x10] sm:$0xff]
    %v1659 = vld [vmem:[#allocation5 + $0x18] sm:$0xff]
    %v1660 = vld [vmem:[#allocation5 + $0x20] sm:$0xff]
    %v1661 = vld [vmem:[#allocation5 + $0x28] sm:$0xff]
    %v1662 = vld [vmem:[#allocation5 + $0x30] sm:$0xff]
    %v1663 = vld [vmem:[#allocation5 + $0x38] sm:$0xff]
    %v1664 = vld [vmem:[#allocation5 + $0x40] sm:$0xff]
    %v1665 = vld [vmem:[#allocation5 + $0x48] sm:$0xff]
    %v1666 = vld [vmem:[#allocation5 + $0x50] sm:$0xff]
    %v1667 = vld [vmem:[#allocation5 + $0x58] sm:$0xff]
    %v1668 = vld [vmem:[#allocation5 + $0x60] sm:$0xff]
    %v1669 = vld [vmem:[#allocation5 + $0x68] sm:$0xff]
    %v1670 = vld [vmem:[#allocation5 + $0x70] sm:$0xff]
    %v1671 = vld [vmem:[#allocation5 + $0x78] sm:$0xff]
    %v1672 = vld [vmem:[#allocation5 + $0x80] sm:$0xff]
    %v1673 = vld [vmem:[#allocation5 + $0x88] sm:$0xff]
    %v1674 = vld [vmem:[#allocation5 + $0x90] sm:$0xff]
    %v1675 = vld [vmem:[#allocation5 + $0x98] sm:$0xff]
    %v1676 = vld [vmem:[#allocation5 + $0xa0] sm:$0xff]
    %v1677 = vld [vmem:[#allocation5 + $0xa8] sm:$0xff]
    %v1678 = vld [vmem:[#allocation5 + $0xb0] sm:$0xff]
    %v1679 = vld [vmem:[#allocation5 + $0xb8] sm:$0xff]
    %v1680 = vld [vmem:[#allocation5 + $0xc0] sm:$0xff]
    %v1681 = vld [vmem:[#allocation5 + $0xc8] sm:$0xff]
    %v1682 = vld [vmem:[#allocation5 + $0xd0] sm:$0xff]
    %v1683 = vld [vmem:[#allocation5 + $0xd8] sm:$0xff]
    %v1684 = vld [vmem:[#allocation5 + $0xe0] sm:$0xff]
    %v1685 = vld [vmem:[#allocation5 + $0xe8] sm:$0xff]
    %v1686 = vld [vmem:[#allocation5 + $0xf0] sm:$0xff]
    %v1687 = vld [vmem:[#allocation5 + $0xf8] sm:$0xff]
    %v1688 = vld [vmem:[#allocation5 + $0x100] sm:$0xff]
    %v1689 = vld [vmem:[#allocation5 + $0x108] sm:$0xff]
    %v1690 = vld [vmem:[#allocation5 + $0x110] sm:$0xff]
    %v1691 = vld [vmem:[#allocation5 + $0x118] sm:$0xff]
    %v1692 = vld [vmem:[#allocation5 + $0x120] sm:$0xff]
    %v1693 = vld [vmem:[#allocation5 + $0x128] sm:$0xff]
    %v1694 = vld [vmem:[#allocation5 + $0x130] sm:$0xff]
    %v1695 = vld [vmem:[#allocation5 + $0x138] sm:$0xff]
    %v1696 = vld [vmem:[#allocation5 + $0x140] sm:$0xff]
    %v1697 = vld [vmem:[#allocation5 + $0x148] sm:$0xff]
    %v1698 = vld [vmem:[#allocation5 + $0x150] sm:$0xff]
    %v1699 = vld [vmem:[#allocation5 + $0x158] sm:$0xff]
    %v1700 = vld [vmem:[#allocation5 + $0x160] sm:$0xff]
    %v1701 = vld [vmem:[#allocation5 + $0x168] sm:$0xff]
    %v1702 = vld [vmem:[#allocation5 + $0x170] sm:$0xff]
    %v1703 = vld [vmem:[#allocation5 + $0x178] sm:$0xff]
    %v1704 = vld [vmem:[#allocation5 + $0x180] sm:$0xff]
    %v1705 = vld [vmem:[#allocation5 + $0x188] sm:$0xff]
    %v1706 = vld [vmem:[#allocation5 + $0x190] sm:$0xff]
    %v1707 = vld [vmem:[#allocation5 + $0x198] sm:$0xff]
    %v1708 = vld [vmem:[#allocation5 + $0x1a0] sm:$0xff]
    %v1709 = vld [vmem:[#allocation5 + $0x1a8] sm:$0xff]
    %v1710 = vld [vmem:[#allocation5 + $0x1b0] sm:$0xff]
    %v1711 = vld [vmem:[#allocation5 + $0x1b8] sm:$0xff]
    %v1712 = vld [vmem:[#allocation5 + $0x1c0] sm:$0xff]
    %v1713 = vld [vmem:[#allocation5 + $0x1c8] sm:$0xff]
    %v1714 = vld [vmem:[#allocation5 + $0x1d0] sm:$0xff]
    %v1715 = vld [vmem:[#allocation5 + $0x1d8] sm:$0xff]
    %v1716 = vld [vmem:[#allocation5 + $0x1e0] sm:$0xff]
    %v1717 = vld [vmem:[#allocation5 + $0x1e8] sm:$0xff]
    %v1718 = vld [vmem:[#allocation5 + $0x1f0] sm:$0xff]
    %v1719 = vld [vmem:[#allocation5 + $0x1f8] sm:$0xff]
    %v1720 = vld [vmem:[%s4] sm:$0x3]
    %v1722 = vlaneseq
    %v1723 = vshrl.u32 %v1722, 7
    %v1724 = vsub.s32 0, %v1723
    %v1725 = vrot.slane %v1720, %v1724
    %v1726 = vlaneseq
    %v1727 = vshrl.u32 %v1726, 7
    %v1728 = vsub.s32 1, %v1727
    %v1729 = vrot.slane %v1720, %v1728
    %v1796 = vunpack.c.l.b16 %v1656
    %v1797 = vunpack.c.h.b16 %v1656
    %v1798 = vunpack.c.l.b16 %v1657
    %v1799 = vunpack.c.h.b16 %v1657
    %v1800 = vunpack.c.l.b16 %v1658
    %v1801 = vunpack.c.h.b16 %v1658
    %v1802 = vunpack.c.l.b16 %v1659
    %v1803 = vunpack.c.h.b16 %v1659
    %v1804 = vunpack.c.l.b16 %v1660
    %v1805 = vunpack.c.h.b16 %v1660
    %v1806 = vunpack.c.l.b16 %v1661
    %v1807 = vunpack.c.h.b16 %v1661
    %v1808 = vunpack.c.l.b16 %v1662
    %v1809 = vunpack.c.h.b16 %v1662
    %v1810 = vunpack.c.l.b16 %v1663
    %v1811 = vunpack.c.h.b16 %v1663
    %v1812 = vunpack.c.l.b16 %v1664
    %v1813 = vunpack.c.h.b16 %v1664
    %v1814 = vunpack.c.l.b16 %v1665
    %v1815 = vunpack.c.h.b16 %v1665
    %v1816 = vunpack.c.l.b16 %v1666
    %v1817 = vunpack.c.h.b16 %v1666
    %v1818 = vunpack.c.l.b16 %v1667
    %v1819 = vunpack.c.h.b16 %v1667
    %v1820 = vunpack.c.l.b16 %v1668
    %v1821 = vunpack.c.h.b16 %v1668
    %v1822 = vunpack.c.l.b16 %v1669
    %v1823 = vunpack.c.h.b16 %v1669
    %v1824 = vunpack.c.l.b16 %v1670
    %v1825 = vunpack.c.h.b16 %v1670
    %v1826 = vunpack.c.l.b16 %v1671
    %v1827 = vunpack.c.h.b16 %v1671
    %v1828 = vunpack.c.l.b16 %v1672
    %v1829 = vunpack.c.h.b16 %v1672
    %v1830 = vunpack.c.l.b16 %v1673
    %v1831 = vunpack.c.h.b16 %v1673
    %v1832 = vunpack.c.l.b16 %v1674
    %v1833 = vunpack.c.h.b16 %v1674
    %v1834 = vunpack.c.l.b16 %v1675
    %v1835 = vunpack.c.h.b16 %v1675
    %v1836 = vunpack.c.l.b16 %v1676
    %v1837 = vunpack.c.h.b16 %v1676
    %v1838 = vunpack.c.l.b16 %v1677
    %v1839 = vunpack.c.h.b16 %v1677
    %v1840 = vunpack.c.l.b16 %v1678
    %v1841 = vunpack.c.h.b16 %v1678
    %v1842 = vunpack.c.l.b16 %v1679
    %v1843 = vunpack.c.h.b16 %v1679
    %v1844 = vunpack.c.l.b16 %v1680
    %v1845 = vunpack.c.h.b16 %v1680
    %v1846 = vunpack.c.l.b16 %v1681
    %v1847 = vunpack.c.h.b16 %v1681
    %v1848 = vunpack.c.l.b16 %v1682
    %v1849 = vunpack.c.h.b16 %v1682
    %v1850 = vunpack.c.l.b16 %v1683
    %v1851 = vunpack.c.h.b16 %v1683
    %v1852 = vunpack.c.l.b16 %v1684
    %v1853 = vunpack.c.h.b16 %v1684
    %v1854 = vunpack.c.l.b16 %v1685
    %v1855 = vunpack.c.h.b16 %v1685
    %v1856 = vunpack.c.l.b16 %v1686
    %v1857 = vunpack.c.h.b16 %v1686
    %v1858 = vunpack.c.l.b16 %v1687
    %v1859 = vunpack.c.h.b16 %v1687
    %v1860 = vunpack.c.l.b16 %v1688
    %v1861 = vunpack.c.h.b16 %v1688
    %v1862 = vunpack.c.l.b16 %v1689
    %v1863 = vunpack.c.h.b16 %v1689
    %v1864 = vunpack.c.l.b16 %v1690
    %v1865 = vunpack.c.h.b16 %v1690
    %v1866 = vunpack.c.l.b16 %v1691
    %v1867 = vunpack.c.h.b16 %v1691
    %v1868 = vunpack.c.l.b16 %v1692
    %v1869 = vunpack.c.h.b16 %v1692
    %v1870 = vunpack.c.l.b16 %v1693
    %v1871 = vunpack.c.h.b16 %v1693
    %v1872 = vunpack.c.l.b16 %v1694
    %v1873 = vunpack.c.h.b16 %v1694
    %v1874 = vunpack.c.l.b16 %v1695
    %v1875 = vunpack.c.h.b16 %v1695
    %v1876 = vunpack.c.l.b16 %v1696
    %v1877 = vunpack.c.h.b16 %v1696
    %v1878 = vunpack.c.l.b16 %v1697
    %v1879 = vunpack.c.h.b16 %v1697
    %v1880 = vunpack.c.l.b16 %v1698
    %v1881 = vunpack.c.h.b16 %v1698
    %v1882 = vunpack.c.l.b16 %v1699
    %v1883 = vunpack.c.h.b16 %v1699
    %v1884 = vunpack.c.l.b16 %v1700
    %v1885 = vunpack.c.h.b16 %v1700
    %v1886 = vunpack.c.l.b16 %v1701
    %v1887 = vunpack.c.h.b16 %v1701
    %v1888 = vunpack.c.l.b16 %v1702
    %v1889 = vunpack.c.h.b16 %v1702
    %v1890 = vunpack.c.l.b16 %v1703
    %v1891 = vunpack.c.h.b16 %v1703
    %v1892 = vunpack.c.l.b16 %v1704
    %v1893 = vunpack.c.h.b16 %v1704
    %v1894 = vunpack.c.l.b16 %v1705
    %v1895 = vunpack.c.h.b16 %v1705
    %v1896 = vunpack.c.l.b16 %v1706
    %v1897 = vunpack.c.h.b16 %v1706
    %v1898 = vunpack.c.l.b16 %v1707
    %v1899 = vunpack.c.h.b16 %v1707
    %v1900 = vunpack.c.l.b16 %v1708
    %v1901 = vunpack.c.h.b16 %v1708
    %v1902 = vunpack.c.l.b16 %v1709
    %v1903 = vunpack.c.h.b16 %v1709
    %v1904 = vunpack.c.l.b16 %v1710
    %v1905 = vunpack.c.h.b16 %v1710
    %v1906 = vunpack.c.l.b16 %v1711
    %v1907 = vunpack.c.h.b16 %v1711
    %v1908 = vunpack.c.l.b16 %v1712
    %v1909 = vunpack.c.h.b16 %v1712
    %v1910 = vunpack.c.l.b16 %v1713
    %v1911 = vunpack.c.h.b16 %v1713
    %v1912 = vunpack.c.l.b16 %v1714
    %v1913 = vunpack.c.h.b16 %v1714
    %v1914 = vunpack.c.l.b16 %v1715
    %v1915 = vunpack.c.h.b16 %v1715
    %v1916 = vunpack.c.l.b16 %v1716
    %v1917 = vunpack.c.h.b16 %v1716
    %v1918 = vunpack.c.l.b16 %v1717
    %v1919 = vunpack.c.h.b16 %v1717
    %v1920 = vunpack.c.l.b16 %v1718
    %v1921 = vunpack.c.h.b16 %v1718
    %v1922 = vunpack.c.l.b16 %v1719
    %v1923 = vunpack.c.h.b16 %v1719
    %v1924 = vpack.c.b16 %v1798, %v1796
    %v1925 = vpack.c.b16 %v1799, %v1797
    %v1926 = vpack.c.b16 %v1802, %v1800
    %v1927 = vpack.c.b16 %v1803, %v1801
    %v1928 = vpack.c.b16 %v1806, %v1804
    %v1929 = vpack.c.b16 %v1807, %v1805
    %v1930 = vpack.c.b16 %v1810, %v1808
    %v1931 = vpack.c.b16 %v1811, %v1809
    %v1932 = vpack.c.b16 %v1814, %v1812
    %v1933 = vpack.c.b16 %v1815, %v1813
    %v1934 = vpack.c.b16 %v1818, %v1816
    %v1935 = vpack.c.b16 %v1819, %v1817
    %v1936 = vpack.c.b16 %v1822, %v1820
    %v1937 = vpack.c.b16 %v1823, %v1821
    %v1938 = vpack.c.b16 %v1826, %v1824
    %v1939 = vpack.c.b16 %v1827, %v1825
    %v1940 = vpack.c.b16 %v1830, %v1828
    %v1941 = vpack.c.b16 %v1831, %v1829
    %v1942 = vpack.c.b16 %v1834, %v1832
    %v1943 = vpack.c.b16 %v1835, %v1833
    %v1944 = vpack.c.b16 %v1838, %v1836
    %v1945 = vpack.c.b16 %v1839, %v1837
    %v1946 = vpack.c.b16 %v1842, %v1840
    %v1947 = vpack.c.b16 %v1843, %v1841
    %v1948 = vpack.c.b16 %v1846, %v1844
    %v1949 = vpack.c.b16 %v1847, %v1845
    %v1950 = vpack.c.b16 %v1850, %v1848
    %v1951 = vpack.c.b16 %v1851, %v1849
    %v1952 = vpack.c.b16 %v1854, %v1852
    %v1953 = vpack.c.b16 %v1855, %v1853
    %v1954 = vpack.c.b16 %v1858, %v1856
    %v1955 = vpack.c.b16 %v1859, %v1857
    %v1956 = vpack.c.b16 %v1862, %v1860
    %v1957 = vpack.c.b16 %v1863, %v1861
    %v1958 = vpack.c.b16 %v1866, %v1864
    %v1959 = vpack.c.b16 %v1867, %v1865
    %v1960 = vpack.c.b16 %v1870, %v1868
    %v1961 = vpack.c.b16 %v1871, %v1869
    %v1962 = vpack.c.b16 %v1874, %v1872
    %v1963 = vpack.c.b16 %v1875, %v1873
    %v1964 = vpack.c.b16 %v1878, %v1876
    %v1965 = vpack.c.b16 %v1879, %v1877
    %v1966 = vpack.c.b16 %v1882, %v1880
    %v1967 = vpack.c.b16 %v1883, %v1881
    %v1968 = vpack.c.b16 %v1886, %v1884
    %v1969 = vpack.c.b16 %v1887, %v1885
    %v1970 = vpack.c.b16 %v1890, %v1888
    %v1971 = vpack.c.b16 %v1891, %v1889
    %v1972 = vpack.c.b16 %v1894, %v1892
    %v1973 = vpack.c.b16 %v1895, %v1893
    %v1974 = vpack.c.b16 %v1898, %v1896
    %v1975 = vpack.c.b16 %v1899, %v1897
    %v1976 = vpack.c.b16 %v1902, %v1900
    %v1977 = vpack.c.b16 %v1903, %v1901
    %v1978 = vpack.c.b16 %v1906, %v1904
    %v1979 = vpack.c.b16 %v1907, %v1905
    %v1980 = vpack.c.b16 %v1910, %v1908
    %v1981 = vpack.c.b16 %v1911, %v1909
    %v1982 = vpack.c.b16 %v1914, %v1912
    %v1983 = vpack.c.b16 %v1915, %v1913
    %v1984 = vpack.c.b16 %v1918, %v1916
    %v1985 = vpack.c.b16 %v1919, %v1917
    %v1986 = vpack.c.b16 %v1922, %v1920
    %v1987 = vpack.c.b16 %v1923, %v1921
    %2052 = vmatprep.subr.bf16.mxu0 %v1925
    %2053 = vmatpush1.bf16.msra.mxu0 %v1924
    %2054 = vmatprep.subr.bf16.mxu0 %v1927
    %2055 = vmatpush1.bf16.msra.mxu0 %v1926
    %2056 = vmatprep.subr.bf16.mxu0 %v1929
    %2057 = vmatpush1.bf16.msra.mxu0 %v1928
    %2058 = vmatprep.subr.bf16.mxu0 %v1931
    %2059 = vmatpush1.bf16.msra.mxu0 %v1930
    %2060 = vmatprep.subr.bf16.mxu0 %v1933
    %2061 = vmatpush1.bf16.msra.mxu0 %v1932
    %2062 = vmatprep.subr.bf16.mxu0 %v1935
    %2063 = vmatpush1.bf16.msra.mxu0 %v1934
    %2064 = vmatprep.subr.bf16.mxu0 %v1937
    %2065 = vmatpush1.bf16.msra.mxu0 %v1936
    %2066 = vmatprep.subr.bf16.mxu0 %v1939
    %2067 = vmatpush1.bf16.msra.mxu0 %v1938
    %2068 = vmatprep.subr.bf16.mxu0 %v1941
    %2069 = vmatpush1.bf16.msra.mxu0 %v1940
    %2070 = vmatprep.subr.bf16.mxu0 %v1943
    %2071 = vmatpush1.bf16.msra.mxu0 %v1942
    %2072 = vmatprep.subr.bf16.mxu0 %v1945
    %2073 = vmatpush1.bf16.msra.mxu0 %v1944
    %2074 = vmatprep.subr.bf16.mxu0 %v1947
    %2075 = vmatpush1.bf16.msra.mxu0 %v1946
    %2076 = vmatprep.subr.bf16.mxu0 %v1949
    %2077 = vmatpush1.bf16.msra.mxu0 %v1948
    %2078 = vmatprep.subr.bf16.mxu0 %v1951
    %2079 = vmatpush1.bf16.msra.mxu0 %v1950
    %2080 = vmatprep.subr.bf16.mxu0 %v1953
    %2081 = vmatpush1.bf16.msra.mxu0 %v1952
    %2082 = vmatprep.subr.bf16.mxu0 %v1955
    %2083 = vmatpush1.bf16.msra.mxu0 %v1954
    %2084 = vmatprep.mubr.bf16.mxu0 %v1653
    %2085 = vmatmul.mubr.bf16.gmra.mrb[0].mxu0 %v1652
    %v2086 = vpop.f32.mrb[0].mxu0
    %v2087 = vadd.f32 %v1725, %v2086
    %v2088 = vpop.f32.mrb[0].mxu0
    %v2089 = vadd.f32 %v1729, %v2088
    %v2090 = vpop.f32.mrb[0].mxu0
    %v2091 = vpop.f32.mrb[0].mxu0
    %2092 = vdwg.mxu0
    %2093 = vmatprep.subr.bf16.mxu0 %v1957
    %2094 = vmatpush1.bf16.msra.mxu0 %v1956
    %2095 = vmatprep.subr.bf16.mxu0 %v1959
    %2096 = vmatpush1.bf16.msra.mxu0 %v1958
    %2097 = vmatprep.subr.bf16.mxu0 %v1961
    %2098 = vmatpush1.bf16.msra.mxu0 %v1960
    %2099 = vmatprep.subr.bf16.mxu0 %v1963
    %2100 = vmatpush1.bf16.msra.mxu0 %v1962
    %2101 = vmatprep.subr.bf16.mxu0 %v1965
    %2102 = vmatpush1.bf16.msra.mxu0 %v1964
    %2103 = vmatprep.subr.bf16.mxu0 %v1967
    %2104 = vmatpush1.bf16.msra.mxu0 %v1966
    %2105 = vmatprep.subr.bf16.mxu0 %v1969
    %2106 = vmatpush1.bf16.msra.mxu0 %v1968
    %2107 = vmatprep.subr.bf16.mxu0 %v1971
    %2108 = vmatpush1.bf16.msra.mxu0 %v1970
    %2109 = vmatprep.subr.bf16.mxu0 %v1973
    %2110 = vmatpush1.bf16.msra.mxu0 %v1972
    %2111 = vmatprep.subr.bf16.mxu0 %v1975
    %2112 = vmatpush1.bf16.msra.mxu0 %v1974
    %2113 = vmatprep.subr.bf16.mxu0 %v1977
    %2114 = vmatpush1.bf16.msra.mxu0 %v1976
    %2115 = vmatprep.subr.bf16.mxu0 %v1979
    %2116 = vmatpush1.bf16.msra.mxu0 %v1978
    %2117 = vmatprep.subr.bf16.mxu0 %v1981
    %2118 = vmatpush1.bf16.msra.mxu0 %v1980
    %2119 = vmatprep.subr.bf16.mxu0 %v1983
    %2120 = vmatpush1.bf16.msra.mxu0 %v1982
    %2121 = vmatprep.subr.bf16.mxu0 %v1985
    %2122 = vmatpush1.bf16.msra.mxu0 %v1984
    %2123 = vmatprep.subr.bf16.mxu0 %v1987
    %2124 = vmatpush1.bf16.msra.mxu0 %v1986
    %2125 = vmatprep.mubr.bf16.mxu0 %v1655
    %2126 = vmatmul.mubr.bf16.gmra.mrb[0].mxu0 %v1654
    %v2127 = vpop.f32.mrb[0].mxu0
    %v2128 = vadd.f32 %v2087, %v2127
    %v2129 = vpop.f32.mrb[0].mxu0
    %v2130 = vadd.f32 %v2089, %v2129
    %v2131 = vpop.f32.mrb[0].mxu0
    %v2132 = vpop.f32.mrb[0].mxu0
    %2133 = vdwg.mxu0
    %v2134 = vmax.f32 %v2128, 0.0
    %v2135 = vmax.f32 %v2130, 0.0
    %v2136 = vpack.c.bf16 %v2134, %v2134
    %v2137 = vpack.c.bf16 %v2135, %v2135
    %v2138 = vld [vmem:[%s5] sm:$0xf]
    %v2139 = vld [vmem:[%s5 + $0x4] sm:$0xf]
    %v2140 = vld [vmem:[%s5 + $0x8] sm:$0xf]
    %v2141 = vld [vmem:[%s5 + $0xc] sm:$0xf]
    %v2142 = vld [vmem:[%s5 + $0x10] sm:$0xf]
    %v2143 = vld [vmem:[%s5 + $0x14] sm:$0xf]
    %v2144 = vld [vmem:[%s5 + $0x18] sm:$0xf]
    %v2145 = vld [vmem:[%s5 + $0x1c] sm:$0xf]
    %v2146 = vld [vmem:[%s5 + $0x20] sm:$0xf]
    %v2147 = vld [vmem:[%s5 + $0x24] sm:$0xf]
    %v2148 = vld [vmem:[%s5 + $0x28] sm:$0xf]
    %v2149 = vld [vmem:[%s5 + $0x2c] sm:$0xf]
    %v2150 = vld [vmem:[%s5 + $0x30] sm:$0xf]
    %v2151 = vld [vmem:[%s5 + $0x34] sm:$0xf]
    %v2152 = vld [vmem:[%s5 + $0x38] sm:$0xf]
    %v2153 = vld [vmem:[%s5 + $0x3c] sm:$0xf]
    %v2154 = vld [vmem:[%s5 + $0x40] sm:$0xf]
    %v2155 = vld [vmem:[%s5 + $0x44] sm:$0xf]
    %v2156 = vld [vmem:[%s5 + $0x48] sm:$0xf]
    %v2157 = vld [vmem:[%s5 + $0x4c] sm:$0xf]
    %v2158 = vld [vmem:[%s5 + $0x50] sm:$0xf]
    %v2159 = vld [vmem:[%s5 + $0x54] sm:$0xf]
    %v2160 = vld [vmem:[%s5 + $0x58] sm:$0xf]
    %v2161 = vld [vmem:[%s5 + $0x5c] sm:$0xf]
    %v2162 = vld [vmem:[%s5 + $0x60] sm:$0xf]
    %v2163 = vld [vmem:[%s5 + $0x64] sm:$0xf]
    %v2164 = vld [vmem:[%s5 + $0x68] sm:$0xf]
    %v2165 = vld [vmem:[%s5 + $0x6c] sm:$0xf]
    %v2166 = vld [vmem:[%s5 + $0x70] sm:$0xf]
    %v2167 = vld [vmem:[%s5 + $0x74] sm:$0xf]
    %v2168 = vld [vmem:[%s5 + $0x78] sm:$0xf]
    %v2169 = vld [vmem:[%s5 + $0x7c] sm:$0xf]
    %v2170 = vld [vmem:[%s6] sm:$0x1]
    %v2172 = vlaneseq
    %v2173 = vshrl.u32 %v2172, 7
    %v2174 = vsub.s32 0, %v2173
    %v2175 = vrot.slane %v2170, %v2174
    %v2209 = vunpack.c.l.b16 %v2138
    %v2210 = vunpack.c.l.b16 %v2139
    %v2211 = vunpack.c.l.b16 %v2140
    %v2212 = vunpack.c.l.b16 %v2141
    %v2213 = vunpack.c.l.b16 %v2142
    %v2214 = vunpack.c.l.b16 %v2143
    %v2215 = vunpack.c.l.b16 %v2144
    %v2216 = vunpack.c.l.b16 %v2145
    %v2217 = vunpack.c.l.b16 %v2146
    %v2218 = vunpack.c.l.b16 %v2147
    %v2219 = vunpack.c.l.b16 %v2148
    %v2220 = vunpack.c.l.b16 %v2149
    %v2221 = vunpack.c.l.b16 %v2150
    %v2222 = vunpack.c.l.b16 %v2151
    %v2223 = vunpack.c.l.b16 %v2152
    %v2224 = vunpack.c.l.b16 %v2153
    %v2225 = vunpack.c.l.b16 %v2154
    %v2226 = vunpack.c.l.b16 %v2155
    %v2227 = vunpack.c.l.b16 %v2156
    %v2228 = vunpack.c.l.b16 %v2157
    %v2229 = vunpack.c.l.b16 %v2158
    %v2230 = vunpack.c.l.b16 %v2159
    %v2231 = vunpack.c.l.b16 %v2160
    %v2232 = vunpack.c.l.b16 %v2161
    %v2233 = vunpack.c.l.b16 %v2162
    %v2234 = vunpack.c.l.b16 %v2163
    %v2235 = vunpack.c.l.b16 %v2164
    %v2236 = vunpack.c.l.b16 %v2165
    %v2237 = vunpack.c.l.b16 %v2166
    %v2238 = vunpack.c.l.b16 %v2167
    %v2239 = vunpack.c.l.b16 %v2168
    %v2240 = vunpack.c.l.b16 %v2169
    %v2241 = vpack.c.b16 %v2210, %v2209
    %v2242 = vpack.c.b16 %v2212, %v2211
    %v2243 = vpack.c.b16 %v2214, %v2213
    %v2244 = vpack.c.b16 %v2216, %v2215
    %v2245 = vpack.c.b16 %v2218, %v2217
    %v2246 = vpack.c.b16 %v2220, %v2219
    %v2247 = vpack.c.b16 %v2222, %v2221
    %v2248 = vpack.c.b16 %v2224, %v2223
    %v2249 = vpack.c.b16 %v2226, %v2225
    %v2250 = vpack.c.b16 %v2228, %v2227
    %v2251 = vpack.c.b16 %v2230, %v2229
    %v2252 = vpack.c.b16 %v2232, %v2231
    %v2253 = vpack.c.b16 %v2234, %v2233
    %v2254 = vpack.c.b16 %v2236, %v2235
    %v2255 = vpack.c.b16 %v2238, %v2237
    %v2256 = vpack.c.b16 %v2240, %v2239
    %2273 = vmatprep.subr.bf16.mxu0 0
    %2274 = vmatpush1.bf16.msra.mxu0 %v2241
    %2275 = vmatprep.subr.bf16.mxu0 0
    %2276 = vmatpush1.bf16.msra.mxu0 %v2242
    %2277 = vmatprep.subr.bf16.mxu0 0
    %2278 = vmatpush1.bf16.msra.mxu0 %v2243
    %2279 = vmatprep.subr.bf16.mxu0 0
    %2280 = vmatpush1.bf16.msra.mxu0 %v2244
    %2281 = vmatprep.subr.bf16.mxu0 0
    %2282 = vmatpush1.bf16.msra.mxu0 %v2245
    %2283 = vmatprep.subr.bf16.mxu0 0
    %2284 = vmatpush1.bf16.msra.mxu0 %v2246
    %2285 = vmatprep.subr.bf16.mxu0 0
    %2286 = vmatpush1.bf16.msra.mxu0 %v2247
    %2287 = vmatprep.subr.bf16.mxu0 0
    %2288 = vmatpush1.bf16.msra.mxu0 %v2248
    %2289 = vmatprep.subr.bf16.mxu0 0
    %2290 = vmatpush1.bf16.msra.mxu0 %v2249
    %2291 = vmatprep.subr.bf16.mxu0 0
    %2292 = vmatpush1.bf16.msra.mxu0 %v2250
    %2293 = vmatprep.subr.bf16.mxu0 0
    %2294 = vmatpush1.bf16.msra.mxu0 %v2251
    %2295 = vmatprep.subr.bf16.mxu0 0
    %2296 = vmatpush1.bf16.msra.mxu0 %v2252
    %2297 = vmatprep.subr.bf16.mxu0 0
    %2298 = vmatpush1.bf16.msra.mxu0 %v2253
    %2299 = vmatprep.subr.bf16.mxu0 0
    %2300 = vmatpush1.bf16.msra.mxu0 %v2254
    %2301 = vmatprep.subr.bf16.mxu0 0
    %2302 = vmatpush1.bf16.msra.mxu0 %v2255
    %2303 = vmatprep.subr.bf16.mxu0 0
    %2304 = vmatpush1.bf16.msra.mxu0 %v2256
    %2305 = vmatprep.mubr.bf16.mxu0 %v2137
    %2306 = vmatmul.mubr.bf16.gmra.mrb[0].mxu0 %v2136
    %v2307 = vpop.f32.mrb[0].mxu0
    %v2308 = vadd.f32 %v2175, %v2307
    %v2309 = vpop.f32.mrb[0].mxu0
    %v2310 = vpop.f32.mrb[0].mxu0
    %v2311 = vpop.f32.mrb[0].mxu0
    %2312 = vdwg.mxu0
    %v2313 = vmax.f32 %v2308, 0.0
    %v2314 = vpack.c.bf16 %v2313, %v2313
    %v2315 = vld [vmem:[%s7] sm:$0xf]
    %v2316 = vld [vmem:[%s7 + $0x4] sm:$0xf]
    %v2317 = vld [vmem:[%s7 + $0x8] sm:$0xf]
    %v2318 = vld [vmem:[%s7 + $0xc] sm:$0xf]
    %v2319 = vld [vmem:[%s7 + $0x10] sm:$0xf]
    %v2320 = vld [vmem:[%s7 + $0x14] sm:$0xf]
    %v2321 = vld [vmem:[%s7 + $0x18] sm:$0xf]
    %v2322 = vld [vmem:[%s7 + $0x1c] sm:$0xf]
    %v2323 = vld [vmem:[%s7 + $0x20] sm:$0xf]
    %v2324 = vld [vmem:[%s7 + $0x24] sm:$0xf]
    %v2325 = vld [vmem:[%s7 + $0x28] sm:$0xf]
    %v2326 = vld [vmem:[%s7 + $0x2c] sm:$0xf]
    %v2327 = vld [vmem:[%s7 + $0x30] sm:$0xf]
    %v2328 = vld [vmem:[%s7 + $0x34] sm:$0xf]
    %v2329 = vld [vmem:[%s7 + $0x38] sm:$0xf]
    %v2330 = vld [vmem:[%s7 + $0x3c] sm:$0xf]
    %v2331 = vld [vmem:[%s8] sm:$0x1]
    %v2333 = vlaneseq
    %v2334 = vshrl.u32 %v2333, 7
    %v2335 = vsub.s32 0, %v2334
    %v2336 = vrot.slane %v2331, %v2335
    %v2354 = vunpack.c.l.b16 %v2315
    %v2355 = vunpack.c.l.b16 %v2316
    %v2356 = vunpack.c.l.b16 %v2317
    %v2357 = vunpack.c.l.b16 %v2318
    %v2358 = vunpack.c.l.b16 %v2319
    %v2359 = vunpack.c.l.b16 %v2320
    %v2360 = vunpack.c.l.b16 %v2321
    %v2361 = vunpack.c.l.b16 %v2322
    %v2362 = vunpack.c.l.b16 %v2323
    %v2363 = vunpack.c.l.b16 %v2324
    %v2364 = vunpack.c.l.b16 %v2325
    %v2365 = vunpack.c.l.b16 %v2326
    %v2366 = vunpack.c.l.b16 %v2327
    %v2367 = vunpack.c.l.b16 %v2328
    %v2368 = vunpack.c.l.b16 %v2329
    %v2369 = vunpack.c.l.b16 %v2330
    %v2370 = vpack.c.b16 %v2355, %v2354
    %v2371 = vpack.c.b16 %v2357, %v2356
    %v2372 = vpack.c.b16 %v2359, %v2358
    %v2373 = vpack.c.b16 %v2361, %v2360
    %v2374 = vpack.c.b16 %v2363, %v2362
    %v2375 = vpack.c.b16 %v2365, %v2364
    %v2376 = vpack.c.b16 %v2367, %v2366
    %v2377 = vpack.c.b16 %v2369, %v2368
    %2386 = vmatprep.subr.bf16.mxu0 0
    %2387 = vmatpush1.bf16.msra.mxu0 %v2370
    %2388 = vmatprep.subr.bf16.mxu0 0
    %2389 = vmatpush1.bf16.msra.mxu0 %v2371
    %2390 = vmatprep.subr.bf16.mxu0 0
    %2391 = vmatpush1.bf16.msra.mxu0 %v2372
    %2392 = vmatprep.subr.bf16.mxu0 0
    %2393 = vmatpush1.bf16.msra.mxu0 %v2373
    %2394 = vmatprep.subr.bf16.mxu0 0
    %2395 = vmatpush1.bf16.msra.mxu0 %v2374
    %2396 = vmatprep.subr.bf16.mxu0 0
    %2397 = vmatpush1.bf16.msra.mxu0 %v2375
    %2398 = vmatprep.subr.bf16.mxu0 0
    %2399 = vmatpush1.bf16.msra.mxu0 %v2376
    %2400 = vmatprep.subr.bf16.mxu0 0
    %2401 = vmatpush1.bf16.msra.mxu0 %v2377
    %2402 = vmatprep.subr.bf16.mxu0 0
    %2403 = vmatpush1.bf16.msra.mxu0 0
    %2404 = vmatprep.subr.bf16.mxu0 0
    %2405 = vmatpush1.bf16.msra.mxu0 0
    %2406 = vmatprep.subr.bf16.mxu0 0
    %2407 = vmatpush1.bf16.msra.mxu0 0
    %2408 = vmatprep.subr.bf16.mxu0 0
    %2409 = vmatpush1.bf16.msra.mxu0 0
    %2410 = vmatprep.subr.bf16.mxu0 0
    %2411 = vmatpush1.bf16.msra.mxu0 0
    %2412 = vmatprep.subr.bf16.mxu0 0
    %2413 = vmatpush1.bf16.msra.mxu0 0
    %2414 = vmatprep.subr.bf16.mxu0 0
    %2415 = vmatpush1.bf16.msra.mxu0 0
    %2416 = vmatprep.subr.bf16.mxu0 0
    %2417 = vmatpush1.bf16.msra.mxu0 0
    %2418 = vmatprep.mubr.bf16.mxu0 0
    %2419 = vmatmul.mubr.bf16.gmra.mrb[0].mxu0 %v2314
    %v2420 = vpop.f32.mrb[0].mxu0
    %v2421 = vadd.f32 %v2336, %v2420
    %v2422 = vpop.f32.mrb[0].mxu0
    %v2423 = vpop.f32.mrb[0].mxu0
    %v2424 = vpop.f32.mrb[0].mxu0
    %2425 = vdwg.mxu0
    %vm2426 = vcmask 74752
    %2427 = vst.msk [vmem:[#allocation7] sm:$0x3] %vm2426, %v2421
    // Predicated region
    $region46: #{fully_connected_forward.1} parent=1 // pred_check
      _
    $region47: #{fully_connected_forward.1} parent=1 // pred_check_branch
      %2429 = sbr.rel (0) target = $region49
    $region48: #{fully_connected_forward.1} parent=1 // pred_region
      %s2431 = ssub.s32 32, 32
      %2432 = vsyncadd [#allocation4], %s2431
      %s2434 = sshll.u32 [#allocation7], 4
      %s2435 = int_to_ptr.vmem [resolvable:$true] %s2434
      %2437 = dma.vmem_to_hbm [thread:$0]  %s2435, 32, %s9, [#allocation4]
    $region49: #{fully_connected_forward.1} parent=1 // pred_fallthru
      _
    // Predicated region
    $region50: #{fully_connected_forward.1} parent=1 // pred_check
      _
    $region51: #{fully_connected_forward.1} parent=1 // pred_check_branch
      %2439 = sbr.rel (0) target = $region53
    $region52: #{fully_connected_forward.1} parent=1 // pred_region
      %2440 = dma.done [#allocation4], 32
    $region53: #{fully_connected_forward.1} parent=1 // pred_fallthru
      _
    %2441 = vsyncpa [#allocation3], 1
    %2442 = vsyncpa [#allocation6], 1
    %2443 = vsyncpa [#allocation4], 1

</llo_original>
